<compile_context>
chip_gen: v7x
topology: tpu7x:2x2x1
jax: 0.10.0
libtpu: 0.0.40
codegen_flags: <defaults>
</compile_context>

<pallas_src>
import functools
import math

import jax
import jax.numpy as jnp
from jax import lax
from jax.experimental import pallas as pl
from jax.experimental.pallas import tpu as pltpu


_VMEM_LIMIT = 48 * 1024 * 1024  # headroom under v7x's 64 MiB VMEM per TC


def _round_up(x, m):
    return ((x + m - 1) // m) * m


def _bf16(x):
    return x.astype(jnp.bfloat16)


def _ln(x, g, b, eps=1e-5):
    """LayerNorm over the last axis; f32 vector math."""
    mean = jnp.mean(x, axis=-1, keepdims=True)
    var = jnp.mean(jnp.square(x - mean), axis=-1, keepdims=True)
    return (x - mean) * lax.rsqrt(var + eps) * g + b


# ----------------------------------------------------------------------------
# Kernel 1: tiled no-bias matmul (patch embedding)
# ----------------------------------------------------------------------------
def _matmul_kernel(x_ref, w_ref, o_ref, acc_ref):
    @pl.when(pl.program_id(2) == 0)
    def _():
        acc_ref[...] = jnp.zeros_like(acc_ref)

    acc_ref[...] += jnp.dot(_bf16(x_ref[...]), _bf16(w_ref[...]),
                            preferred_element_type=jnp.float32)

    @pl.when(pl.program_id(2) == pl.num_programs(2) - 1)
    def _():
        o_ref[...] = acc_ref[...].astype(o_ref.dtype)


def linear_tiled(x, w, *, tm=256, tn=256, tk=512):
    """(M, K) @ (K, N) -> (M, N), no bias. Tiled grid + f32 VMEM accumulator."""
    M, K = x.shape
    _, N = w.shape
    tm = min(tm, _round_up(M, 8))
    tn = min(tn, _round_up(N, 128))
    tk = min(tk, _round_up(K, 128))
    Mp, Np, Kp = _round_up(M, tm), _round_up(N, tn), _round_up(K, tk)
    xp = jnp.pad(x, ((0, Mp - M), (0, Kp - K)))
    wp = jnp.pad(w, ((0, Kp - K), (0, Np - N)))
    out = pl.pallas_call(
        _matmul_kernel,
        out_shape=jax.ShapeDtypeStruct((Mp, Np), jnp.float32),
        grid=(Mp // tm, Np // tn, Kp // tk),
        in_specs=[pl.BlockSpec((tm, tk), lambda i, j, k: (i, k)),
                  pl.BlockSpec((tk, tn), lambda i, j, k: (k, j))],
        out_specs=pl.BlockSpec((tm, tn), lambda i, j, k: (i, j)),
        scratch_shapes=[pltpu.VMEM((tm, tn), jnp.float32)],
        compiler_params=pltpu.CompilerParams(
            dimension_semantics=("parallel", "parallel", "arbitrary"),
            vmem_limit_bytes=_VMEM_LIMIT),
        cost_estimate=pl.CostEstimate(
            flops=2 * Mp * Np * Kp, transcendentals=0,
            bytes_accessed=4 * (Mp * Kp + Kp * Np + Mp * Np)),
    )(xp, wp)
    return out[:M, :N]


# ----------------------------------------------------------------------------
# Kernel 2: fused attention block
#   ln_pre -> ln1 -> QKV -> per-head attention (padded keys masked) ->
#   head-merge/out-proj (as per-head accumulation) -> residual add.
# One grid step per batch element (parallel axis); everything stays in VMEM.
# ----------------------------------------------------------------------------
def _attn_block_kernel(tok_ref, lnp_g, lnp_b, ln1_g, ln1_b,
                       wq_ref, wk_ref, wv_ref, bq_ref, bk_ref, bv_ref,
                       wo_ref, bo_ref, o_ref, *, n_heads, s_valid):
    Sp, D = tok_ref.shape[1], tok_ref.shape[2]
    t = tok_ref[0].astype(jnp.float32)                    # (Sp, D)
    resid = _ln(t, lnp_g[...], lnp_b[...])                # ln_pre fused in
    h = _ln(resid, ln1_g[...], ln1_b[...])                # ln1
    hb = _bf16(h)

    # additive mask over padded key positions (hoisted out of the head loop)
    kpos = lax.broadcasted_iota(jnp.int32, (Sp, Sp), 1)
    kmask = jnp.where(kpos < s_valid, 0.0, -1e30).astype(jnp.float32)

    acc = jnp.zeros((Sp, D), jnp.float32)
    for hi in range(n_heads):
        # 1/sqrt(hd) is pre-folded into wq / bq on the host side.
        q = jnp.dot(hb, _bf16(wq_ref[hi]),
                    preferred_element_type=jnp.float32) + bq_ref[hi]
        k = jnp.dot(hb, _bf16(wk_ref[hi]),
                    preferred_element_type=jnp.float32) + bk_ref[hi]
        v = jnp.dot(hb, _bf16(wv_ref[hi]),
                    preferred_element_type=jnp.float32) + bv_ref[hi]
        # q @ k^T without a materialized transpose
        s = lax.dot_general(_bf16(q), _bf16(k), (((1,), (1,)), ((), ())),
                            preferred_element_type=jnp.float32)
        s = s + kmask
        s = s - jnp.max(s, axis=-1, keepdims=True)
        p = jnp.exp(s)
        p = p * pl.reciprocal(jnp.sum(p, axis=-1, keepdims=True), approx=True)
        o_h = jnp.dot(_bf16(p), _bf16(v), preferred_element_type=jnp.float32)
        # concat-of-heads @ W_out  ==  sum over heads of o_h @ W_out[h-rows]
        acc = acc + jnp.dot(_bf16(o_h), _bf16(wo_ref[hi]),
                            preferred_element_type=jnp.float32)

    o_ref[0] = (resid + acc + bo_ref[...]).astype(o_ref.dtype)


def attention_block(tokens, p, *, n_heads, s_valid):
    B, Sp, D = tokens.shape
    hd = D // n_heads
    scale = 1.0 / math.sqrt(hd)
    qkv_w, qkv_b = p["qkv_w"], p["qkv_b"]

    def split_heads_w(w):  # (D, D) -> (n_heads, D, hd)
        return w.reshape(D, n_heads, hd).transpose(1, 0, 2)

    wq = split_heads_w(qkv_w[:, :D]) * scale
    wk = split_heads_w(qkv_w[:, D:2 * D])
    wv = split_heads_w(qkv_w[:, 2 * D:])
    bq = qkv_b[:D].reshape(n_heads, 1, hd) * scale
    bk = qkv_b[D:2 * D].reshape(n_heads, 1, hd)
    bv = qkv_b[2 * D:].reshape(n_heads, 1, hd)
    wo = p["attn_out_w"].reshape(n_heads, hd, D)
    bo = p["attn_out_b"].reshape(1, D)

    vec_map = lambda b: (0, 0)
    mat_map = lambda b: (0, 0, 0)
    kernel = functools.partial(_attn_block_kernel, n_heads=n_heads, s_valid=s_valid)
    flops = B * (2 * Sp * D * 3 * D + 4 * n_heads * Sp * Sp * hd + 2 * Sp * D * D)
    return pl.pallas_call(
        kernel,
        out_shape=jax.ShapeDtypeStruct((B, Sp, D), jnp.float32),
        grid=(B,),
        in_specs=[
            pl.BlockSpec((1, Sp, D), lambda b: (b, 0, 0)),
            pl.BlockSpec((1, D), vec_map), pl.BlockSpec((1, D), vec_map),
            pl.BlockSpec((1, D), vec_map), pl.BlockSpec((1, D), vec_map),
            pl.BlockSpec((n_heads, D, hd), mat_map),
            pl.BlockSpec((n_heads, D, hd), mat_map),
            pl.BlockSpec((n_heads, D, hd), mat_map),
            pl.BlockSpec((n_heads, 1, hd), mat_map),
            pl.BlockSpec((n_heads, 1, hd), mat_map),
            pl.BlockSpec((n_heads, 1, hd), mat_map),
            pl.BlockSpec((n_heads, hd, D), mat_map),
            pl.BlockSpec((1, D), vec_map),
        ],
        out_specs=pl.BlockSpec((1, Sp, D), lambda b: (b, 0, 0)),
        compiler_params=pltpu.CompilerParams(
            dimension_semantics=("parallel",),
            vmem_limit_bytes=_VMEM_LIMIT),
        cost_estimate=pl.CostEstimate(
            flops=int(flops),
            transcendentals=int(B * n_heads * Sp * Sp),
            bytes_accessed=int(4 * (2 * B * Sp * D + 4 * D * D + 8 * D))),
    )(tokens, p["ln_pre_g"].reshape(1, D), p["ln_pre_b"].reshape(1, D),
      p["ln1_g"].reshape(1, D), p["ln1_b"].reshape(1, D),
      wq, wk, wv, bq, bk, bv, wo, bo)


# ----------------------------------------------------------------------------
# Kernel 3: fused MLP block  (ln2 -> fc -> QuickGELU -> proj -> residual)
# Grid over row tiles (parallel); the (rows, mlp_dim) intermediate stays in VMEM.
# ----------------------------------------------------------------------------
def _mlp_block_kernel(x_ref, ln2_g, ln2_b, fc_w, fc_b, pj_w, pj_b, o_ref):
    x = x_ref[...].astype(jnp.float32)
    h = _ln(x, ln2_g[...], ln2_b[...])
    h = jnp.dot(_bf16(h), _bf16(fc_w[...]),
                preferred_element_type=jnp.float32) + fc_b[...]
    h = h * jax.nn.sigmoid(1.702 * h)          # QuickGELU, f32 vector math
    y = jnp.dot(_bf16(h), _bf16(pj_w[...]),
                preferred_element_type=jnp.float32) + pj_b[...]
    o_ref[...] = (x + y).astype(o_ref.dtype)


def mlp_block(x, p):
    M, D = x.shape
    mlp_dim = p["mlp_fc_w"].shape[1]
    tm = min(256, _round_up(M, 8))
    Mp = _round_up(M, tm)
    xp = jnp.pad(x, ((0, Mp - M), (0, 0)))
    full = lambda i: (0, 0)
    out = pl.pallas_call(
        _mlp_block_kernel,
        out_shape=jax.ShapeDtypeStruct((Mp, D), jnp.float32),
        grid=(Mp // tm,),
        in_specs=[
            pl.BlockSpec((tm, D), lambda i: (i, 0)),
            pl.BlockSpec((1, D), full), pl.BlockSpec((1, D), full),
            pl.BlockSpec((D, mlp_dim), full), pl.BlockSpec((1, mlp_dim), full),
            pl.BlockSpec((mlp_dim, D), full), pl.BlockSpec((1, D), full),
        ],
        out_specs=pl.BlockSpec((tm, D), lambda i: (i, 0)),
        compiler_params=pltpu.CompilerParams(
            dimension_semantics=("parallel",),
            vmem_limit_bytes=_VMEM_LIMIT),
        cost_estimate=pl.CostEstimate(
            flops=int(4 * Mp * D * mlp_dim),
            transcendentals=int(Mp * mlp_dim),
            bytes_accessed=int(4 * (2 * Mp * D + 2 * D * mlp_dim))),
    )(xp, p["ln2_g"].reshape(1, D), p["ln2_b"].reshape(1, D),
      p["mlp_fc_w"], p["mlp_fc_b"].reshape(1, mlp_dim),
      p["mlp_proj_w"], p["mlp_proj_b"].reshape(1, D))
    return out[:M]


# ----------------------------------------------------------------------------
# Kernel 4: fused head  (ln_post on cls tokens -> final projection, no bias)
# Rows padded to 8 sublanes, output padded to 128 lanes (lane-dense store).
# ----------------------------------------------------------------------------
def _head_kernel(x_ref, g_ref, b_ref, w_ref, o_ref):
    h = _ln(x_ref[...].astype(jnp.float32), g_ref[...], b_ref[...])
    o_ref[...] = jnp.dot(_bf16(h), _bf16(w_ref[...]),
                         preferred_element_type=jnp.float32).astype(o_ref.dtype)


def head_project(cls_tok, p, *, embed_dim):
    B, D = cls_tok.shape
    Bp = _round_up(B, 8)
    Ep = _round_up(embed_dim, 128)
    xp = jnp.pad(cls_tok, ((0, Bp - B), (0, 0)))
    wp = jnp.pad(p["proj"], ((0, 0), (0, Ep - embed_dim)))
    out = pl.pallas_call(
        _head_kernel,
        out_shape=jax.ShapeDtypeStruct((Bp, Ep), jnp.float32),
        in_specs=[pl.BlockSpec((Bp, D), lambda: (0, 0)),
                  pl.BlockSpec((1, D), lambda: (0, 0)),
                  pl.BlockSpec((1, D), lambda: (0, 0)),
                  pl.BlockSpec((D, Ep), lambda: (0, 0))],
        out_specs=pl.BlockSpec((Bp, Ep), lambda: (0, 0)),
    )(xp, p["ln_post_g"].reshape(1, D), p["ln_post_b"].reshape(1, D), wp)
    return out[:B, :embed_dim]


# ----------------------------------------------------------------------------
# Synthetic CLIP-style image encoder parameters (deterministic)
# ----------------------------------------------------------------------------
def init_params(key, *, C, P, D, n_heads, mlp_dim, embed_dim, n_patches):
    ks = jax.random.split(key, 12)
    sd = 0.02

    def rnd(k, shape):
        return sd * jax.random.normal(k, shape, dtype=jnp.float32)

    return {
        "patch_w": rnd(ks[0], (D, C, P, P)),          # conv weight, no bias
        "cls": rnd(ks[1], (1, 1, D)),
        "pos": rnd(ks[2], (n_patches + 1, D)),
        "ln_pre_g": jnp.ones((D,), jnp.float32),
        "ln_pre_b": jnp.zeros((D,), jnp.float32),
        "ln1_g": jnp.ones((D,), jnp.float32),
        "ln1_b": jnp.zeros((D,), jnp.float32),
        "qkv_w": rnd(ks[3], (D, 3 * D)),
        "qkv_b": jnp.zeros((3 * D,), jnp.float32),
        "attn_out_w": rnd(ks[4], (D, D)),
        "attn_out_b": jnp.zeros((D,), jnp.float32),
        "ln2_g": jnp.ones((D,), jnp.float32),
        "ln2_b": jnp.zeros((D,), jnp.float32),
        "mlp_fc_w": rnd(ks[5], (D, mlp_dim)),
        "mlp_fc_b": jnp.zeros((mlp_dim,), jnp.float32),
        "mlp_proj_w": rnd(ks[6], (mlp_dim, D)),
        "mlp_proj_b": jnp.zeros((D,), jnp.float32),
        "ln_post_g": jnp.ones((D,), jnp.float32),
        "ln_post_b": jnp.zeros((D,), jnp.float32),
        "proj": rnd(ks[7], (D, embed_dim)),           # final projection, no bias
    }


def encode_image(params, x, *, P, D, n_heads, embed_dim):
    """x: (B, C, H, W) float32 NCHW (like PyTorch). Returns (B, embed_dim)."""
    B, C, H, W = x.shape
    Hp, Wp = H // P, W // P
    nP = Hp * Wp
    S = nP + 1
    Sp = _round_up(S, 8)        # pad sequence to a sublane multiple

    # --- patch extraction (layout glue, plain JAX) ---------------------------
    patches = x.reshape(B, C, Hp, P, Wp, P).transpose(0, 2, 4, 1, 3, 5)
    patches = patches.reshape(B * nP, C * P * P)
    w_patch = params["patch_w"].reshape(D, C * P * P).T
    emb = linear_tiled(patches, w_patch).reshape(B, nP, D)   # conv has no bias

    # --- [cls] + positional embedding, pad seq --------------------------------
    cls = jnp.broadcast_to(params["cls"], (B, 1, D))
    tokens = jnp.concatenate([cls, emb], axis=1) + params["pos"][None]
    tokens = jnp.pad(tokens, ((0, 0), (0, Sp - S), (0, 0)))

    # --- fused ln_pre + transformer attention half (residual included) --------
    resid = attention_block(tokens, params, n_heads=n_heads, s_valid=S)
    # --- fused MLP half (residual included) ------------------------------------
    resid = mlp_block(resid.reshape(B * Sp, D), params).reshape(B, Sp, D)

    # --- pool class token, ln_post + projection (fused) ------------------------
    cls_tok = resid[:, 0, :]
    # NOTE: matches encode_image(..., normalize=False); no L2 norm here.
    return head_project(cls_tok, params, embed_dim=embed_dim)


# ----------------------------------------------------------------------------
# ImageEncoderWrapper equivalent: forward(input) -> encode_image_func(input).
# torch.no_grad has no analogue needed: we never differentiate (inference only).
# ----------------------------------------------------------------------------
def image_encoder_wrapper_forward(params, x, *, P, D, n_heads, embed_dim):
    return encode_image(params, x, P=P, D=D, n_heads=n_heads, embed_dim=embed_dim)


if __name__ == "__main__":
    # Small shapes consistent with a ViT image encoder.
    B, C, H, W = 2, 3, 16, 16
    P = 4                       # 4x4 patches -> 16 patches, seq = 17 (padded to 24)
    D = 32                      # hidden width
    n_heads = 2
    mlp_dim = 4 * D
    embed_dim = 16
    n_patches = (H // P) * (W // P)

    key = jax.random.PRNGKey(0)
    k_params, k_input = jax.random.split(key)
    params = init_params(k_params, C=C, P=P, D=D, n_heads=n_heads,
                         mlp_dim=mlp_dim, embed_dim=embed_dim,
                         n_patches=n_patches)
    x = jax.random.normal(k_input, (B, C, H, W), dtype=jnp.float32)

    fwd = jax.jit(functools.partial(image_encoder_wrapper_forward,
                                    P=P, D=D, n_heads=n_heads,
                                    embed_dim=embed_dim))
    out = jax.block_until_ready(fwd(params, x))
    assert out.shape == (B, embed_dim) and out.dtype == jnp.float32
    assert bool(jnp.all(jnp.isfinite(out)))
    print("KERNEL_OK")
</pallas_src>

<mosaic_0001>
module attributes {stable_mosaic.version = 11 : i64} {
  func.func @_matmul_kernel(%arg0: i32, %arg1: i32, %arg2: i32, %arg3: memref<32x128xf32, #tpu.memory_space<vmem>>, %arg4: memref<128x128xf32, #tpu.memory_space<vmem>>, %arg5: memref<32x128xf32, #tpu.memory_space<vmem>>, %arg6: memref<32x128xf32, #tpu.memory_space<vmem>>) attributes {dimension_semantics = [#tpu.dimension_semantics<parallel>, #tpu.dimension_semantics<parallel>, #tpu.dimension_semantics<arbitrary>], iteration_bounds = array<i64: 1, 1, 1>, scalar_prefetch = 0 : i64, scratch_operands = 1 : i64, tpu.core_type = #tpu.core_type<tc>, window_params = [{transform_indices = @transform_0, window_bounds = array<i64: 32, 128>}, {transform_indices = @transform_1, window_bounds = array<i64: 128, 128>}, {transform_indices = @transform_2, window_bounds = array<i64: 32, 128>}]} {
    %c0_i32 = arith.constant 0 : i32
    %0 = arith.cmpi eq, %arg2, %c0_i32 : i32
    %1 = arith.extui %0 : i1 to i32
    %c0_i32_0 = arith.constant 0 : i32
    %2 = arith.cmpi ne, %1, %c0_i32_0 : i32
    scf.if %2 {
      %cst_10 = arith.constant 0.000000e+00 : f32
      %14 = vector.broadcast %cst_10 : f32 to vector<32x128xf32>
      %c0_11 = arith.constant 0 : index
      %c0_12 = arith.constant 0 : index
      %15 = vector.load %arg6[%c0_11, %c0_12] : memref<32x128xf32, #tpu.memory_space<vmem>>, vector<32x128xf32>
      tpu.vector_store %arg6[%c0_11, %c0_12], %14 {strides = array<i32>} : memref<32x128xf32, #tpu.memory_space<vmem>>, vector<32x128xf32>,
    } else {
    }
    %c0 = arith.constant 0 : index
    %c0_1 = arith.constant 0 : index
    %3 = vector.load %arg6[%c0, %c0_1] : memref<32x128xf32, #tpu.memory_space<vmem>>, vector<32x128xf32>
    %c0_2 = arith.constant 0 : index
    %c0_3 = arith.constant 0 : index
    %4 = vector.load %arg3[%c0_2, %c0_3] : memref<32x128xf32, #tpu.memory_space<vmem>>, vector<32x128xf32>
    %5 = arith.truncf %4 : vector<32x128xf32> to vector<32x128xbf16>
    %c0_4 = arith.constant 0 : index
    %c0_5 = arith.constant 0 : index
    %6 = vector.load %arg4[%c0_4, %c0_5] : memref<128x128xf32, #tpu.memory_space<vmem>>, vector<128x128xf32>
    %7 = arith.truncf %6 : vector<128x128xf32> to vector<128x128xbf16>
    %cst = arith.constant dense<0.000000e+00> : vector<32x128xf32>
    %8 = tpu.matmul %5, %7, %cst {dimension_numbers = #tpu.dot_dimension_numbers<[1], [0], [0], [1], [0, 0, 1, 1], [], []>} : vector<32x128xbf16>, vector<128x128xbf16>, vector<32x128xf32> -> vector<32x128xf32>
    %9 = arith.addf %3, %8 : vector<32x128xf32>
    %c0_6 = arith.constant 0 : index
    %c0_7 = arith.constant 0 : index
    %10 = vector.load %arg6[%c0_6, %c0_7] : memref<32x128xf32, #tpu.memory_space<vmem>>, vector<32x128xf32>
    tpu.vector_store %arg6[%c0_6, %c0_7], %9 {strides = array<i32>} : memref<32x128xf32, #tpu.memory_space<vmem>>, vector<32x128xf32>,
    %c0_i32_8 = arith.constant 0 : i32
    %11 = arith.cmpi eq, %arg2, %c0_i32_8 : i32
    %12 = arith.extui %11 : i1 to i32
    %c0_i32_9 = arith.constant 0 : i32
    %13 = arith.cmpi ne, %12, %c0_i32_9 : i32
    scf.if %13 {
      %c0_10 = arith.constant 0 : index
      %c0_11 = arith.constant 0 : index
      %14 = vector.load %arg6[%c0_10, %c0_11] : memref<32x128xf32, #tpu.memory_space<vmem>>, vector<32x128xf32>
      %c0_12 = arith.constant 0 : index
      %c0_13 = arith.constant 0 : index
      %15 = vector.load %arg5[%c0_12, %c0_13] : memref<32x128xf32, #tpu.memory_space<vmem>>, vector<32x128xf32>
      tpu.vector_store %arg5[%c0_12, %c0_13], %14 {strides = array<i32>} : memref<32x128xf32, #tpu.memory_space<vmem>>, vector<32x128xf32>,
    } else {
    }
    return
  }
  func.func @transform_0(%arg0: i32, %arg1: i32, %arg2: i32) -> (i32, i32) {
    %c0_i32 = arith.constant 0 : i32
    return %arg0, %arg2 : i32, i32
  }
  func.func @transform_1(%arg0: i32, %arg1: i32, %arg2: i32) -> (i32, i32) {
    %c0_i32 = arith.constant 0 : i32
    return %arg2, %arg1 : i32, i32
  }
  func.func @transform_2(%arg0: i32, %arg1: i32, %arg2: i32) -> (i32, i32) {
    %c0_i32 = arith.constant 0 : i32
    return %arg0, %arg1 : i32, i32
  }
}

module attributes {stable_mosaic.version = 11 : i64} {
  func.func @_attn_block_kernel(%arg0: i32, %arg1: memref<1x24x32xf32, #tpu.memory_space<vmem>>, %arg2: memref<1x32xf32, #tpu.memory_space<vmem>>, %arg3: memref<1x32xf32, #tpu.memory_space<vmem>>, %arg4: memref<1x32xf32, #tpu.memory_space<vmem>>, %arg5: memref<1x32xf32, #tpu.memory_space<vmem>>, %arg6: memref<2x32x16xf32, #tpu.memory_space<vmem>>, %arg7: memref<2x32x16xf32, #tpu.memory_space<vmem>>, %arg8: memref<2x32x16xf32, #tpu.memory_space<vmem>>, %arg9: memref<2x1x16xf32, #tpu.memory_space<vmem>>, %arg10: memref<2x1x16xf32, #tpu.memory_space<vmem>>, %arg11: memref<2x1x16xf32, #tpu.memory_space<vmem>>, %arg12: memref<2x16x32xf32, #tpu.memory_space<vmem>>, %arg13: memref<1x32xf32, #tpu.memory_space<vmem>>, %arg14: memref<1x24x32xf32, #tpu.memory_space<vmem>>) attributes {dimension_semantics = [#tpu.dimension_semantics<parallel>], iteration_bounds = array<i64: 2>, scalar_prefetch = 0 : i64, scratch_operands = 0 : i64, tpu.core_type = #tpu.core_type<tc>, window_params = [{transform_indices = @transform_0, window_bounds = array<i64: 1, 24, 32>}, {pipeline_mode = #tpu.pipeline_mode<synchronous>, transform_indices = @transform_1, window_bounds = array<i64: 1, 32>}, {pipeline_mode = #tpu.pipeline_mode<synchronous>, transform_indices = @transform_2, window_bounds = array<i64: 1, 32>}, {pipeline_mode = #tpu.pipeline_mode<synchronous>, transform_indices = @transform_3, window_bounds = array<i64: 1, 32>}, {pipeline_mode = #tpu.pipeline_mode<synchronous>, transform_indices = @transform_4, window_bounds = array<i64: 1, 32>}, {pipeline_mode = #tpu.pipeline_mode<synchronous>, transform_indices = @transform_5, window_bounds = array<i64: 2, 32, 16>}, {pipeline_mode = #tpu.pipeline_mode<synchronous>, transform_indices = @transform_6, window_bounds = array<i64: 2, 32, 16>}, {pipeline_mode = #tpu.pipeline_mode<synchronous>, transform_indices = @transform_7, window_bounds = array<i64: 2, 32, 16>}, {pipeline_mode = #tpu.pipeline_mode<synchronous>, transform_indices = @transform_8, window_bounds = array<i64: 2, 1, 16>}, {pipeline_mode = #tpu.pipeline_mode<synchronous>, transform_indices = @transform_9, window_bounds = array<i64: 2, 1, 16>}, {pipeline_mode = #tpu.pipeline_mode<synchronous>, transform_indices = @transform_10, window_bounds = array<i64: 2, 1, 16>}, {pipeline_mode = #tpu.pipeline_mode<synchronous>, transform_indices = @transform_11, window_bounds = array<i64: 2, 16, 32>}, {pipeline_mode = #tpu.pipeline_mode<synchronous>, transform_indices = @transform_12, window_bounds = array<i64: 1, 32>}, {transform_indices = @transform_13, window_bounds = array<i64: 1, 24, 32>}]} {
    %c0 = arith.constant 0 : index
    %c0_0 = arith.constant 0 : index
    %c0_1 = arith.constant 0 : index
    %0 = vector.load %arg1[%c0, %c0_0, %c0_1] : memref<1x24x32xf32, #tpu.memory_space<vmem>>, vector<1x24x32xf32>
    %1 = vector.shape_cast %0 : vector<1x24x32xf32> to vector<24x32xf32>
    %c0_2 = arith.constant 0 : index
    %c0_3 = arith.constant 0 : index
    %2 = vector.load %arg2[%c0_2, %c0_3] : memref<1x32xf32, #tpu.memory_space<vmem>>, vector<1x32xf32>
    %c0_4 = arith.constant 0 : index
    %c0_5 = arith.constant 0 : index
    %3 = vector.load %arg3[%c0_4, %c0_5] : memref<1x32xf32, #tpu.memory_space<vmem>>, vector<1x32xf32>
    %cst = arith.constant dense<0.000000e+00> : vector<24xf32>
    %4 = vector.multi_reduction <add>, %1, %cst [1] : vector<24x32xf32> to vector<24xf32>
    %5 = vector.shape_cast %4 : vector<24xf32> to vector<24x1xf32>
    %cst_6 = arith.constant 3.200000e+01 : f32
    %6 = vector.broadcast %cst_6 : f32 to vector<24x1xf32>
    %7 = arith.divf %5, %6 : vector<24x1xf32>
    %8 = vector.broadcast %7 : vector<24x1xf32> to vector<24x32xf32>
    %9 = arith.subf %1, %8 : vector<24x32xf32>
    %10 = arith.mulf %9, %9 : vector<24x32xf32>
    %cst_7 = arith.constant dense<0.000000e+00> : vector<24xf32>
    %11 = vector.multi_reduction <add>, %10, %cst_7 [1] : vector<24x32xf32> to vector<24xf32>
    %12 = vector.shape_cast %11 : vector<24xf32> to vector<24x1xf32>
    %cst_8 = arith.constant 3.200000e+01 : f32
    %13 = vector.broadcast %cst_8 : f32 to vector<24x1xf32>
    %14 = arith.divf %12, %13 : vector<24x1xf32>
    %15 = vector.broadcast %7 : vector<24x1xf32> to vector<24x32xf32>
    %16 = arith.subf %1, %15 : vector<24x32xf32>
    %cst_9 = arith.constant 9.99999974E-6 : f32
    %17 = vector.broadcast %cst_9 : f32 to vector<24x1xf32>
    %18 = arith.addf %14, %17 : vector<24x1xf32>
    %19 = math.rsqrt %18 : vector<24x1xf32>
    %20 = vector.broadcast %19 : vector<24x1xf32> to vector<24x32xf32>
    %21 = arith.mulf %16, %20 : vector<24x32xf32>
    %22 = vector.broadcast %2 : vector<1x32xf32> to vector<24x32xf32>
    %23 = arith.mulf %21, %22 : vector<24x32xf32>
    %24 = vector.broadcast %3 : vector<1x32xf32> to vector<24x32xf32>
    %25 = arith.addf %23, %24 : vector<24x32xf32>
    %c0_10 = arith.constant 0 : index
    %c0_11 = arith.constant 0 : index
    %26 = vector.load %arg4[%c0_10, %c0_11] : memref<1x32xf32, #tpu.memory_space<vmem>>, vector<1x32xf32>
    %c0_12 = arith.constant 0 : index
    %c0_13 = arith.constant 0 : index
    %27 = vector.load %arg5[%c0_12, %c0_13] : memref<1x32xf32, #tpu.memory_space<vmem>>, vector<1x32xf32>
    %cst_14 = arith.constant dense<0.000000e+00> : vector<24xf32>
    %28 = vector.multi_reduction <add>, %25, %cst_14 [1] : vector<24x32xf32> to vector<24xf32>
    %29 = vector.shape_cast %28 : vector<24xf32> to vector<24x1xf32>
    %cst_15 = arith.constant 3.200000e+01 : f32
    %30 = vector.broadcast %cst_15 : f32 to vector<24x1xf32>
    %31 = arith.divf %29, %30 : vector<24x1xf32>
    %32 = vector.broadcast %31 : vector<24x1xf32> to vector<24x32xf32>
    %33 = arith.subf %25, %32 : vector<24x32xf32>
    %34 = arith.mulf %33, %33 : vector<24x32xf32>
    %cst_16 = arith.constant dense<0.000000e+00> : vector<24xf32>
    %35 = vector.multi_reduction <add>, %34, %cst_16 [1] : vector<24x32xf32> to vector<24xf32>
    %36 = vector.shape_cast %35 : vector<24xf32> to vector<24x1xf32>
    %cst_17 = arith.constant 3.200000e+01 : f32
    %37 = vector.broadcast %cst_17 : f32 to vector<24x1xf32>
    %38 = arith.divf %36, %37 : vector<24x1xf32>
    %39 = vector.broadcast %31 : vector<24x1xf32> to vector<24x32xf32>
    %40 = arith.subf %25, %39 : vector<24x32xf32>
    %cst_18 = arith.constant 9.99999974E-6 : f32
    %41 = vector.broadcast %cst_18 : f32 to vector<24x1xf32>
    %42 = arith.addf %38, %41 : vector<24x1xf32>
    %43 = math.rsqrt %42 : vector<24x1xf32>
    %44 = vector.broadcast %43 : vector<24x1xf32> to vector<24x32xf32>
    %45 = arith.mulf %40, %44 : vector<24x32xf32>
    %46 = vector.broadcast %26 : vector<1x32xf32> to vector<24x32xf32>
    %47 = arith.mulf %45, %46 : vector<24x32xf32>
    %48 = vector.broadcast %27 : vector<1x32xf32> to vector<24x32xf32>
    %49 = arith.addf %47, %48 : vector<24x32xf32>
    %50 = arith.truncf %49 : vector<24x32xf32> to vector<24x32xbf16>
    %51 = tpu.iota {dimensions = array<i32: 1>} : vector<24x24xi32>
    %c17_i32 = arith.constant 17 : i32
    %52 = vector.broadcast %c17_i32 : i32 to vector<24x24xi32>
    %53 = arith.cmpi slt, %51, %52 : vector<24x24xi32>
    %cst_19 = arith.constant 0.000000e+00 : f32
    %cst_20 = arith.constant -1.000000e+30 : f32
    %54 = vector.broadcast %cst_19 : f32 to vector<24x24xf32>
    %55 = vector.broadcast %cst_20 : f32 to vector<24x24xf32>
    %56 = arith.select %53, %54, %55 : vector<24x24xi1>, vector<24x24xf32>
    %cst_21 = arith.constant 0.000000e+00 : f32
    %57 = vector.broadcast %cst_21 : f32 to vector<24x32xf32>
    %c0_22 = arith.constant 0 : index
    %c0_23 = arith.constant 0 : index
    %c0_24 = arith.constant 0 : index
    %58 = vector.load %arg6[%c0_22, %c0_23, %c0_24] : memref<2x32x16xf32, #tpu.memory_space<vmem>>, vector<1x32x16xf32>
    %59 = vector.shape_cast %58 : vector<1x32x16xf32> to vector<32x16xf32>
    %60 = arith.truncf %59 : vector<32x16xf32> to vector<32x16xbf16>
    %cst_25 = arith.constant dense<0.000000e+00> : vector<24x16xf32>
    %61 = tpu.matmul %50, %60, %cst_25 {dimension_numbers = #tpu.dot_dimension_numbers<[1], [0], [0], [1], [0, 0, 1, 1], [], []>} : vector<24x32xbf16>, vector<32x16xbf16>, vector<24x16xf32> -> vector<24x16xf32>
    %c0_26 = arith.constant 0 : index
    %c0_27 = arith.constant 0 : index
    %c0_28 = arith.constant 0 : index
    %62 = vector.load %arg9[%c0_26, %c0_27, %c0_28] : memref<2x1x16xf32, #tpu.memory_space<vmem>>, vector<1x1x16xf32>
    %63 = vector.shape_cast %62 : vector<1x1x16xf32> to vector<1x16xf32>
    %64 = vector.broadcast %63 : vector<1x16xf32> to vector<24x16xf32>
    %65 = arith.addf %61, %64 : vector<24x16xf32>
    %c0_29 = arith.constant 0 : index
    %c0_30 = arith.constant 0 : index
    %c0_31 = arith.constant 0 : index
    %66 = vector.load %arg7[%c0_29, %c0_30, %c0_31] : memref<2x32x16xf32, #tpu.memory_space<vmem>>, vector<1x32x16xf32>
    %67 = vector.shape_cast %66 : vector<1x32x16xf32> to vector<32x16xf32>
    %68 = arith.truncf %67 : vector<32x16xf32> to vector<32x16xbf16>
    %cst_32 = arith.constant dense<0.000000e+00> : vector<24x16xf32>
    %69 = tpu.matmul %50, %68, %cst_32 {dimension_numbers = #tpu.dot_dimension_numbers<[1], [0], [0], [1], [0, 0, 1, 1], [], []>} : vector<24x32xbf16>, vector<32x16xbf16>, vector<24x16xf32> -> vector<24x16xf32>
    %c0_33 = arith.constant 0 : index
    %c0_34 = arith.constant 0 : index
    %c0_35 = arith.constant 0 : index
    %70 = vector.load %arg10[%c0_33, %c0_34, %c0_35] : memref<2x1x16xf32, #tpu.memory_space<vmem>>, vector<1x1x16xf32>
    %71 = vector.shape_cast %70 : vector<1x1x16xf32> to vector<1x16xf32>
    %72 = vector.broadcast %71 : vector<1x16xf32> to vector<24x16xf32>
    %73 = arith.addf %69, %72 : vector<24x16xf32>
    %c0_36 = arith.constant 0 : index
    %c0_37 = arith.constant 0 : index
    %c0_38 = arith.constant 0 : index
    %74 = vector.load %arg8[%c0_36, %c0_37, %c0_38] : memref<2x32x16xf32, #tpu.memory_space<vmem>>, vector<1x32x16xf32>
    %75 = vector.shape_cast %74 : vector<1x32x16xf32> to vector<32x16xf32>
    %76 = arith.truncf %75 : vector<32x16xf32> to vector<32x16xbf16>
    %cst_39 = arith.constant dense<0.000000e+00> : vector<24x16xf32>
    %77 = tpu.matmul %50, %76, %cst_39 {dimension_numbers = #tpu.dot_dimension_numbers<[1], [0], [0], [1], [0, 0, 1, 1], [], []>} : vector<24x32xbf16>, vector<32x16xbf16>, vector<24x16xf32> -> vector<24x16xf32>
    %c0_40 = arith.constant 0 : index
    %c0_41 = arith.constant 0 : index
    %c0_42 = arith.constant 0 : index
    %78 = vector.load %arg11[%c0_40, %c0_41, %c0_42] : memref<2x1x16xf32, #tpu.memory_space<vmem>>, vector<1x1x16xf32>
    %79 = vector.shape_cast %78 : vector<1x1x16xf32> to vector<1x16xf32>
    %80 = vector.broadcast %79 : vector<1x16xf32> to vector<24x16xf32>
    %81 = arith.addf %77, %80 : vector<24x16xf32>
    %82 = arith.truncf %65 : vector<24x16xf32> to vector<24x16xbf16>
    %83 = arith.truncf %73 : vector<24x16xf32> to vector<24x16xbf16>
    %cst_43 = arith.constant dense<0.000000e+00> : vector<24x24xf32>
    %84 = tpu.matmul %82, %83, %cst_43 {dimension_numbers = #tpu.dot_dimension_numbers<[1], [1], [0], [0], [0, 0, 1, 0], [], []>} : vector<24x16xbf16>, vector<24x16xbf16>, vector<24x24xf32> -> vector<24x24xf32>
    %85 = arith.addf %84, %56 : vector<24x24xf32>
    %cst_44 = arith.constant dense<0xFF800000> : vector<24xf32>
    %86 = vector.multi_reduction <maximumf>, %85, %cst_44 [1] : vector<24x24xf32> to vector<24xf32>
    %87 = vector.shape_cast %86 : vector<24xf32> to vector<24x1xf32>
    %88 = vector.broadcast %87 : vector<24x1xf32> to vector<24x24xf32>
    %89 = arith.subf %85, %88 : vector<24x24xf32>
    %90 = math.exp %89 : vector<24x24xf32>
    %cst_45 = arith.constant dense<0.000000e+00> : vector<24xf32>
    %91 = vector.multi_reduction <add>, %90, %cst_45 [1] : vector<24x24xf32> to vector<24xf32>
    %92 = vector.shape_cast %91 : vector<24xf32> to vector<24x1xf32>
    %93 = tpu.reciprocal %92 {approx = true} : vector<24x1xf32> -> vector<24x1xf32>
    %94 = vector.broadcast %93 : vector<24x1xf32> to vector<24x24xf32>
    %95 = arith.mulf %90, %94 : vector<24x24xf32>
    %96 = arith.truncf %95 : vector<24x24xf32> to vector<24x24xbf16>
    %97 = arith.truncf %81 : vector<24x16xf32> to vector<24x16xbf16>
    %cst_46 = arith.constant dense<0.000000e+00> : vector<24x16xf32>
    %98 = tpu.matmul %96, %97, %cst_46 {dimension_numbers = #tpu.dot_dimension_numbers<[1], [0], [0], [1], [0, 0, 1, 1], [], []>} : vector<24x24xbf16>, vector<24x16xbf16>, vector<24x16xf32> -> vector<24x16xf32>
    %99 = arith.truncf %98 : vector<24x16xf32> to vector<24x16xbf16>
    %c0_47 = arith.constant 0 : index
    %c0_48 = arith.constant 0 : index
    %c0_49 = arith.constant 0 : index
    %100 = vector.load %arg12[%c0_47, %c0_48, %c0_49] : memref<2x16x32xf32, #tpu.memory_space<vmem>>, vector<1x16x32xf32>
    %101 = vector.shape_cast %100 : vector<1x16x32xf32> to vector<16x32xf32>
    %102 = arith.truncf %101 : vector<16x32xf32> to vector<16x32xbf16>
    %cst_50 = arith.constant dense<0.000000e+00> : vector<24x32xf32>
    %103 = tpu.matmul %99, %102, %cst_50 {dimension_numbers = #tpu.dot_dimension_numbers<[1], [0], [0], [1], [0, 0, 1, 1], [], []>} : vector<24x16xbf16>, vector<16x32xbf16>, vector<24x32xf32> -> vector<24x32xf32>
    %104 = arith.addf %57, %103 : vector<24x32xf32>
    %c1 = arith.constant 1 : index
    %c0_51 = arith.constant 0 : index
    %c0_52 = arith.constant 0 : index
    %105 = vector.load %arg6[%c1, %c0_51, %c0_52] : memref<2x32x16xf32, #tpu.memory_space<vmem>>, vector<1x32x16xf32>
    %106 = vector.shape_cast %105 : vector<1x32x16xf32> to vector<32x16xf32>
    %107 = arith.truncf %106 : vector<32x16xf32> to vector<32x16xbf16>
    %cst_53 = arith.constant dense<0.000000e+00> : vector<24x16xf32>
    %108 = tpu.matmul %50, %107, %cst_53 {dimension_numbers = #tpu.dot_dimension_numbers<[1], [0], [0], [1], [0, 0, 1, 1], [], []>} : vector<24x32xbf16>, vector<32x16xbf16>, vector<24x16xf32> -> vector<24x16xf32>
    %c1_54 = arith.constant 1 : index
    %c0_55 = arith.constant 0 : index
    %c0_56 = arith.constant 0 : index
    %109 = vector.load %arg9[%c1_54, %c0_55, %c0_56] : memref<2x1x16xf32, #tpu.memory_space<vmem>>, vector<1x1x16xf32>
    %110 = vector.shape_cast %109 : vector<1x1x16xf32> to vector<1x16xf32>
    %111 = vector.broadcast %110 : vector<1x16xf32> to vector<24x16xf32>
    %112 = arith.addf %108, %111 : vector<24x16xf32>
    %c1_57 = arith.constant 1 : index
    %c0_58 = arith.constant 0 : index
    %c0_59 = arith.constant 0 : index
    %113 = vector.load %arg7[%c1_57, %c0_58, %c0_59] : memref<2x32x16xf32, #tpu.memory_space<vmem>>, vector<1x32x16xf32>
    %114 = vector.shape_cast %113 : vector<1x32x16xf32> to vector<32x16xf32>
    %115 = arith.truncf %114 : vector<32x16xf32> to vector<32x16xbf16>
    %cst_60 = arith.constant dense<0.000000e+00> : vector<24x16xf32>
    %116 = tpu.matmul %50, %115, %cst_60 {dimension_numbers = #tpu.dot_dimension_numbers<[1], [0], [0], [1], [0, 0, 1, 1], [], []>} : vector<24x32xbf16>, vector<32x16xbf16>, vector<24x16xf32> -> vector<24x16xf32>
    %c1_61 = arith.constant 1 : index
    %c0_62 = arith.constant 0 : index
    %c0_63 = arith.constant 0 : index
    %117 = vector.load %arg10[%c1_61, %c0_62, %c0_63] : memref<2x1x16xf32, #tpu.memory_space<vmem>>, vector<1x1x16xf32>
    %118 = vector.shape_cast %117 : vector<1x1x16xf32> to vector<1x16xf32>
    %119 = vector.broadcast %118 : vector<1x16xf32> to vector<24x16xf32>
    %120 = arith.addf %116, %119 : vector<24x16xf32>
    %c1_64 = arith.constant 1 : index
    %c0_65 = arith.constant 0 : index
    %c0_66 = arith.constant 0 : index
    %121 = vector.load %arg8[%c1_64, %c0_65, %c0_66] : memref<2x32x16xf32, #tpu.memory_space<vmem>>, vector<1x32x16xf32>
    %122 = vector.shape_cast %121 : vector<1x32x16xf32> to vector<32x16xf32>
    %123 = arith.truncf %122 : vector<32x16xf32> to vector<32x16xbf16>
    %cst_67 = arith.constant dense<0.000000e+00> : vector<24x16xf32>
    %124 = tpu.matmul %50, %123, %cst_67 {dimension_numbers = #tpu.dot_dimension_numbers<[1], [0], [0], [1], [0, 0, 1, 1], [], []>} : vector<24x32xbf16>, vector<32x16xbf16>, vector<24x16xf32> -> vector<24x16xf32>
    %c1_68 = arith.constant 1 : index
    %c0_69 = arith.constant 0 : index
    %c0_70 = arith.constant 0 : index
    %125 = vector.load %arg11[%c1_68, %c0_69, %c0_70] : memref<2x1x16xf32, #tpu.memory_space<vmem>>, vector<1x1x16xf32>
    %126 = vector.shape_cast %125 : vector<1x1x16xf32> to vector<1x16xf32>
    %127 = vector.broadcast %126 : vector<1x16xf32> to vector<24x16xf32>
    %128 = arith.addf %124, %127 : vector<24x16xf32>
    %129 = arith.truncf %112 : vector<24x16xf32> to vector<24x16xbf16>
    %130 = arith.truncf %120 : vector<24x16xf32> to vector<24x16xbf16>
    %cst_71 = arith.constant dense<0.000000e+00> : vector<24x24xf32>
    %131 = tpu.matmul %129, %130, %cst_71 {dimension_numbers = #tpu.dot_dimension_numbers<[1], [1], [0], [0], [0, 0, 1, 0], [], []>} : vector<24x16xbf16>, vector<24x16xbf16>, vector<24x24xf32> -> vector<24x24xf32>
    %132 = arith.addf %131, %56 : vector<24x24xf32>
    %cst_72 = arith.constant dense<0xFF800000> : vector<24xf32>
    %133 = vector.multi_reduction <maximumf>, %132, %cst_72 [1] : vector<24x24xf32> to vector<24xf32>
    %134 = vector.shape_cast %133 : vector<24xf32> to vector<24x1xf32>
    %135 = vector.broadcast %134 : vector<24x1xf32> to vector<24x24xf32>
    %136 = arith.subf %132, %135 : vector<24x24xf32>
    %137 = math.exp %136 : vector<24x24xf32>
    %cst_73 = arith.constant dense<0.000000e+00> : vector<24xf32>
    %138 = vector.multi_reduction <add>, %137, %cst_73 [1] : vector<24x24xf32> to vector<24xf32>
    %139 = vector.shape_cast %138 : vector<24xf32> to vector<24x1xf32>
    %140 = tpu.reciprocal %139 {approx = true} : vector<24x1xf32> -> vector<24x1xf32>
    %141 = vector.broadcast %140 : vector<24x1xf32> to vector<24x24xf32>
    %142 = arith.mulf %137, %141 : vector<24x24xf32>
    %143 = arith.truncf %142 : vector<24x24xf32> to vector<24x24xbf16>
    %144 = arith.truncf %128 : vector<24x16xf32> to vector<24x16xbf16>
    %cst_74 = arith.constant dense<0.000000e+00> : vector<24x16xf32>
    %145 = tpu.matmul %143, %144, %cst_74 {dimension_numbers = #tpu.dot_dimension_numbers<[1], [0], [0], [1], [0, 0, 1, 1], [], []>} : vector<24x24xbf16>, vector<24x16xbf16>, vector<24x16xf32> -> vector<24x16xf32>
    %146 = arith.truncf %145 : vector<24x16xf32> to vector<24x16xbf16>
    %c1_75 = arith.constant 1 : index
    %c0_76 = arith.constant 0 : index
    %c0_77 = arith.constant 0 : index
    %147 = vector.load %arg12[%c1_75, %c0_76, %c0_77] : memref<2x16x32xf32, #tpu.memory_space<vmem>>, vector<1x16x32xf32>
    %148 = vector.shape_cast %147 : vector<1x16x32xf32> to vector<16x32xf32>
    %149 = arith.truncf %148 : vector<16x32xf32> to vector<16x32xbf16>
    %cst_78 = arith.constant dense<0.000000e+00> : vector<24x32xf32>
    %150 = tpu.matmul %146, %149, %cst_78 {dimension_numbers = #tpu.dot_dimension_numbers<[1], [0], [0], [1], [0, 0, 1, 1], [], []>} : vector<24x16xbf16>, vector<16x32xbf16>, vector<24x32xf32> -> vector<24x32xf32>
    %151 = arith.addf %104, %150 : vector<24x32xf32>
    %152 = arith.addf %25, %151 : vector<24x32xf32>
    %c0_79 = arith.constant 0 : index
    %c0_80 = arith.constant 0 : index
    %153 = vector.load %arg13[%c0_79, %c0_80] : memref<1x32xf32, #tpu.memory_space<vmem>>, vector<1x32xf32>
    %154 = vector.broadcast %153 : vector<1x32xf32> to vector<24x32xf32>
    %155 = arith.addf %152, %154 : vector<24x32xf32>
    %c0_81 = arith.constant 0 : index
    %c0_82 = arith.constant 0 : index
    %c0_83 = arith.constant 0 : index
    %156 = vector.load %arg14[%c0_81, %c0_82, %c0_83] : memref<1x24x32xf32, #tpu.memory_space<vmem>>, vector<1x24x32xf32>
    %157 = vector.shape_cast %156 : vector<1x24x32xf32> to vector<24x32xf32>
    %158 = vector.shape_cast %155 : vector<24x32xf32> to vector<1x24x32xf32>
    tpu.vector_store %arg14[%c0_81, %c0_82, %c0_83], %158 {strides = array<i32>} : memref<1x24x32xf32, #tpu.memory_space<vmem>>, vector<1x24x32xf32>,
    return
  }
  func.func @transform_0(%arg0: i32) -> (i32, i32, i32) {
    %c0_i32 = arith.constant 0 : i32
    %c0_i32_0 = arith.constant 0 : i32
    %c0_i32_1 = arith.constant 0 : i32
    return %arg0, %c0_i32, %c0_i32_0 : i32, i32, i32
  }
  func.func @transform_1(%arg0: i32) -> (i32, i32) {
    %c0_i32 = arith.constant 0 : i32
    %c0_i32_0 = arith.constant 0 : i32
    %c0_i32_1 = arith.constant 0 : i32
    return %c0_i32, %c0_i32_0 : i32, i32
  }
  func.func @transform_2(%arg0: i32) -> (i32, i32) {
    %c0_i32 = arith.constant 0 : i32
    %c0_i32_0 = arith.constant 0 : i32
    %c0_i32_1 = arith.constant 0 : i32
    return %c0_i32, %c0_i32_0 : i32, i32
  }
  func.func @transform_3(%arg0: i32) -> (i32, i32) {
    %c0_i32 = arith.constant 0 : i32
    %c0_i32_0 = arith.constant 0 : i32
    %c0_i32_1 = arith.constant 0 : i32
    return %c0_i32, %c0_i32_0 : i32, i32
  }
  func.func @transform_4(%arg0: i32) -> (i32, i32) {
    %c0_i32 = arith.constant 0 : i32
    %c0_i32_0 = arith.constant 0 : i32
    %c0_i32_1 = arith.constant 0 : i32
    return %c0_i32, %c0_i32_0 : i32, i32
  }
  func.func @transform_5(%arg0: i32) -> (i32, i32, i32) {
    %c0_i32 = arith.constant 0 : i32
    %c0_i32_0 = arith.constant 0 : i32
    %c0_i32_1 = arith.constant 0 : i32
    %c0_i32_2 = arith.constant 0 : i32
    return %c0_i32, %c0_i32_0, %c0_i32_1 : i32, i32, i32
  }
  func.func @transform_6(%arg0: i32) -> (i32, i32, i32) {
    %c0_i32 = arith.constant 0 : i32
    %c0_i32_0 = arith.constant 0 : i32
    %c0_i32_1 = arith.constant 0 : i32
    %c0_i32_2 = arith.constant 0 : i32
    return %c0_i32, %c0_i32_0, %c0_i32_1 : i32, i32, i32
  }
  func.func @transform_7(%arg0: i32) -> (i32, i32, i32) {
    %c0_i32 = arith.constant 0 : i32
    %c0_i32_0 = arith.constant 0 : i32
    %c0_i32_1 = arith.constant 0 : i32
    %c0_i32_2 = arith.constant 0 : i32
    return %c0_i32, %c0_i32_0, %c0_i32_1 : i32, i32, i32
  }
  func.func @transform_8(%arg0: i32) -> (i32, i32, i32) {
    %c0_i32 = arith.constant 0 : i32
    %c0_i32_0 = arith.constant 0 : i32
    %c0_i32_1 = arith.constant 0 : i32
    %c0_i32_2 = arith.constant 0 : i32
    return %c0_i32, %c0_i32_0, %c0_i32_1 : i32, i32, i32
  }
  func.func @transform_9(%arg0: i32) -> (i32, i32, i32) {
    %c0_i32 = arith.constant 0 : i32
    %c0_i32_0 = arith.constant 0 : i32
    %c0_i32_1 = arith.constant 0 : i32
    %c0_i32_2 = arith.constant 0 : i32
    return %c0_i32, %c0_i32_0, %c0_i32_1 : i32, i32, i32
  }
  func.func @transform_10(%arg0: i32) -> (i32, i32, i32) {
    %c0_i32 = arith.constant 0 : i32
    %c0_i32_0 = arith.constant 0 : i32
    %c0_i32_1 = arith.constant 0 : i32
    %c0_i32_2 = arith.constant 0 : i32
    return %c0_i32, %c0_i32_0, %c0_i32_1 : i32, i32, i32
  }
  func.func @transform_11(%arg0: i32) -> (i32, i32, i32) {
    %c0_i32 = arith.constant 0 : i32
    %c0_i32_0 = arith.constant 0 : i32
    %c0_i32_1 = arith.constant 0 : i32
    %c0_i32_2 = arith.constant 0 : i32
    return %c0_i32, %c0_i32_0, %c0_i32_1 : i32, i32, i32
  }
  func.func @transform_12(%arg0: i32) -> (i32, i32) {
    %c0_i32 = arith.constant 0 : i32
    %c0_i32_0 = arith.constant 0 : i32
    %c0_i32_1 = arith.constant 0 : i32
    return %c0_i32, %c0_i32_0 : i32, i32
  }
  func.func @transform_13(%arg0: i32) -> (i32, i32, i32) {
    %c0_i32 = arith.constant 0 : i32
    %c0_i32_0 = arith.constant 0 : i32
    %c0_i32_1 = arith.constant 0 : i32
    return %arg0, %c0_i32, %c0_i32_0 : i32, i32, i32
  }
}

module attributes {stable_mosaic.version = 11 : i64} {
  func.func @_mlp_block_kernel(%arg0: i32, %arg1: memref<48x32xf32, #tpu.memory_space<vmem>>, %arg2: memref<1x32xf32, #tpu.memory_space<vmem>>, %arg3: memref<1x32xf32, #tpu.memory_space<vmem>>, %arg4: memref<32x128xf32, #tpu.memory_space<vmem>>, %arg5: memref<1x128xf32, #tpu.memory_space<vmem>>, %arg6: memref<128x32xf32, #tpu.memory_space<vmem>>, %arg7: memref<1x32xf32, #tpu.memory_space<vmem>>, %arg8: memref<48x32xf32, #tpu.memory_space<vmem>>) attributes {dimension_semantics = [#tpu.dimension_semantics<parallel>], iteration_bounds = array<i64: 1>, scalar_prefetch = 0 : i64, scratch_operands = 0 : i64, tpu.core_type = #tpu.core_type<tc>, window_params = [{transform_indices = @transform_0, window_bounds = array<i64: 48, 32>}, {pipeline_mode = #tpu.pipeline_mode<synchronous>, transform_indices = @transform_1, window_bounds = array<i64: 1, 32>}, {pipeline_mode = #tpu.pipeline_mode<synchronous>, transform_indices = @transform_2, window_bounds = array<i64: 1, 32>}, {pipeline_mode = #tpu.pipeline_mode<synchronous>, transform_indices = @transform_3, window_bounds = array<i64: 32, 128>}, {pipeline_mode = #tpu.pipeline_mode<synchronous>, transform_indices = @transform_4, window_bounds = array<i64: 1, 128>}, {pipeline_mode = #tpu.pipeline_mode<synchronous>, transform_indices = @transform_5, window_bounds = array<i64: 128, 32>}, {pipeline_mode = #tpu.pipeline_mode<synchronous>, transform_indices = @transform_6, window_bounds = array<i64: 1, 32>}, {transform_indices = @transform_7, window_bounds = array<i64: 48, 32>}]} {
    %c0 = arith.constant 0 : index
    %c0_0 = arith.constant 0 : index
    %0 = vector.load %arg1[%c0, %c0_0] : memref<48x32xf32, #tpu.memory_space<vmem>>, vector<48x32xf32>
    %c0_1 = arith.constant 0 : index
    %c0_2 = arith.constant 0 : index
    %1 = vector.load %arg2[%c0_1, %c0_2] : memref<1x32xf32, #tpu.memory_space<vmem>>, vector<1x32xf32>
    %c0_3 = arith.constant 0 : index
    %c0_4 = arith.constant 0 : index
    %2 = vector.load %arg3[%c0_3, %c0_4] : memref<1x32xf32, #tpu.memory_space<vmem>>, vector<1x32xf32>
    %cst = arith.constant dense<0.000000e+00> : vector<48xf32>
    %3 = vector.multi_reduction <add>, %0, %cst [1] : vector<48x32xf32> to vector<48xf32>
    %4 = vector.shape_cast %3 : vector<48xf32> to vector<48x1xf32>
    %cst_5 = arith.constant 3.200000e+01 : f32
    %5 = vector.broadcast %cst_5 : f32 to vector<48x1xf32>
    %6 = arith.divf %4, %5 : vector<48x1xf32>
    %7 = vector.broadcast %6 : vector<48x1xf32> to vector<48x32xf32>
    %8 = arith.subf %0, %7 : vector<48x32xf32>
    %9 = arith.mulf %8, %8 : vector<48x32xf32>
    %cst_6 = arith.constant dense<0.000000e+00> : vector<48xf32>
    %10 = vector.multi_reduction <add>, %9, %cst_6 [1] : vector<48x32xf32> to vector<48xf32>
    %11 = vector.shape_cast %10 : vector<48xf32> to vector<48x1xf32>
    %cst_7 = arith.constant 3.200000e+01 : f32
    %12 = vector.broadcast %cst_7 : f32 to vector<48x1xf32>
    %13 = arith.divf %11, %12 : vector<48x1xf32>
    %14 = vector.broadcast %6 : vector<48x1xf32> to vector<48x32xf32>
    %15 = arith.subf %0, %14 : vector<48x32xf32>
    %cst_8 = arith.constant 9.99999974E-6 : f32
    %16 = vector.broadcast %cst_8 : f32 to vector<48x1xf32>
    %17 = arith.addf %13, %16 : vector<48x1xf32>
    %18 = math.rsqrt %17 : vector<48x1xf32>
    %19 = vector.broadcast %18 : vector<48x1xf32> to vector<48x32xf32>
    %20 = arith.mulf %15, %19 : vector<48x32xf32>
    %21 = vector.broadcast %1 : vector<1x32xf32> to vector<48x32xf32>
    %22 = arith.mulf %20, %21 : vector<48x32xf32>
    %23 = vector.broadcast %2 : vector<1x32xf32> to vector<48x32xf32>
    %24 = arith.addf %22, %23 : vector<48x32xf32>
    %25 = arith.truncf %24 : vector<48x32xf32> to vector<48x32xbf16>
    %c0_9 = arith.constant 0 : index
    %c0_10 = arith.constant 0 : index
    %26 = vector.load %arg4[%c0_9, %c0_10] : memref<32x128xf32, #tpu.memory_space<vmem>>, vector<32x128xf32>
    %27 = arith.truncf %26 : vector<32x128xf32> to vector<32x128xbf16>
    %cst_11 = arith.constant dense<0.000000e+00> : vector<48x128xf32>
    %28 = tpu.matmul %25, %27, %cst_11 {dimension_numbers = #tpu.dot_dimension_numbers<[1], [0], [0], [1], [0, 0, 1, 1], [], []>} : vector<48x32xbf16>, vector<32x128xbf16>, vector<48x128xf32> -> vector<48x128xf32>
    %c0_12 = arith.constant 0 : index
    %c0_13 = arith.constant 0 : index
    %29 = vector.load %arg5[%c0_12, %c0_13] : memref<1x128xf32, #tpu.memory_space<vmem>>, vector<1x128xf32>
    %30 = vector.broadcast %29 : vector<1x128xf32> to vector<48x128xf32>
    %31 = arith.addf %28, %30 : vector<48x128xf32>
    %cst_14 = arith.constant 1.702000e+00 : f32
    %32 = vector.broadcast %cst_14 : f32 to vector<48x128xf32>
    %33 = arith.mulf %32, %31 : vector<48x128xf32>
    %34 = arith.negf %33 : vector<48x128xf32>
    %35 = math.exp %34 : vector<48x128xf32>
    %cst_15 = arith.constant 1.000000e+00 : f32
    %36 = vector.broadcast %cst_15 : f32 to vector<48x128xf32>
    %37 = arith.addf %36, %35 : vector<48x128xf32>
    %38 = arith.divf %36, %37 : vector<48x128xf32>
    %39 = arith.mulf %31, %38 : vector<48x128xf32>
    %40 = arith.truncf %39 : vector<48x128xf32> to vector<48x128xbf16>
    %c0_16 = arith.constant 0 : index
    %c0_17 = arith.constant 0 : index
    %41 = vector.load %arg6[%c0_16, %c0_17] : memref<128x32xf32, #tpu.memory_space<vmem>>, vector<128x32xf32>
    %42 = arith.truncf %41 : vector<128x32xf32> to vector<128x32xbf16>
    %cst_18 = arith.constant dense<0.000000e+00> : vector<48x32xf32>
    %43 = tpu.matmul %40, %42, %cst_18 {dimension_numbers = #tpu.dot_dimension_numbers<[1], [0], [0], [1], [0, 0, 1, 1], [], []>} : vector<48x128xbf16>, vector<128x32xbf16>, vector<48x32xf32> -> vector<48x32xf32>
    %c0_19 = arith.constant 0 : index
    %c0_20 = arith.constant 0 : index
    %44 = vector.load %arg7[%c0_19, %c0_20] : memref<1x32xf32, #tpu.memory_space<vmem>>, vector<1x32xf32>
    %45 = vector.broadcast %44 : vector<1x32xf32> to vector<48x32xf32>
    %46 = arith.addf %43, %45 : vector<48x32xf32>
    %47 = arith.addf %0, %46 : vector<48x32xf32>
    %c0_21 = arith.constant 0 : index
    %c0_22 = arith.constant 0 : index
    %48 = vector.load %arg8[%c0_21, %c0_22] : memref<48x32xf32, #tpu.memory_space<vmem>>, vector<48x32xf32>
    tpu.vector_store %arg8[%c0_21, %c0_22], %47 {strides = array<i32>} : memref<48x32xf32, #tpu.memory_space<vmem>>, vector<48x32xf32>,
    return
  }
  func.func @transform_0(%arg0: i32) -> (i32, i32) {
    %c0_i32 = arith.constant 0 : i32
    %c0_i32_0 = arith.constant 0 : i32
    return %arg0, %c0_i32 : i32, i32
  }
  func.func @transform_1(%arg0: i32) -> (i32, i32) {
    %c0_i32 = arith.constant 0 : i32
    %c0_i32_0 = arith.constant 0 : i32
    %c0_i32_1 = arith.constant 0 : i32
    return %c0_i32, %c0_i32_0 : i32, i32
  }
  func.func @transform_2(%arg0: i32) -> (i32, i32) {
    %c0_i32 = arith.constant 0 : i32
    %c0_i32_0 = arith.constant 0 : i32
    %c0_i32_1 = arith.constant 0 : i32
    return %c0_i32, %c0_i32_0 : i32, i32
  }
  func.func @transform_3(%arg0: i32) -> (i32, i32) {
    %c0_i32 = arith.constant 0 : i32
    %c0_i32_0 = arith.constant 0 : i32
    %c0_i32_1 = arith.constant 0 : i32
    return %c0_i32, %c0_i32_0 : i32, i32
  }
  func.func @transform_4(%arg0: i32) -> (i32, i32) {
    %c0_i32 = arith.constant 0 : i32
    %c0_i32_0 = arith.constant 0 : i32
    %c0_i32_1 = arith.constant 0 : i32
    return %c0_i32, %c0_i32_0 : i32, i32
  }
  func.func @transform_5(%arg0: i32) -> (i32, i32) {
    %c0_i32 = arith.constant 0 : i32
    %c0_i32_0 = arith.constant 0 : i32
    %c0_i32_1 = arith.constant 0 : i32
    return %c0_i32, %c0_i32_0 : i32, i32
  }
  func.func @transform_6(%arg0: i32) -> (i32, i32) {
    %c0_i32 = arith.constant 0 : i32
    %c0_i32_0 = arith.constant 0 : i32
    %c0_i32_1 = arith.constant 0 : i32
    return %c0_i32, %c0_i32_0 : i32, i32
  }
  func.func @transform_7(%arg0: i32) -> (i32, i32) {
    %c0_i32 = arith.constant 0 : i32
    %c0_i32_0 = arith.constant 0 : i32
    return %arg0, %c0_i32 : i32, i32
  }
}

module attributes {stable_mosaic.version = 11 : i64} {
  func.func @_head_kernel(%arg0: memref<8x32xf32, #tpu.memory_space<vmem>>, %arg1: memref<1x32xf32, #tpu.memory_space<vmem>>, %arg2: memref<1x32xf32, #tpu.memory_space<vmem>>, %arg3: memref<32x128xf32, #tpu.memory_space<vmem>>, %arg4: memref<8x128xf32, #tpu.memory_space<vmem>>) attributes {dimension_semantics = [], scalar_prefetch = 0 : i64, scratch_operands = 0 : i64, tpu.core_type = #tpu.core_type<tc>} {
    %c0 = arith.constant 0 : index
    %c0_0 = arith.constant 0 : index
    %0 = vector.load %arg0[%c0, %c0_0] : memref<8x32xf32, #tpu.memory_space<vmem>>, vector<8x32xf32>
    %c0_1 = arith.constant 0 : index
    %c0_2 = arith.constant 0 : index
    %1 = vector.load %arg1[%c0_1, %c0_2] : memref<1x32xf32, #tpu.memory_space<vmem>>, vector<1x32xf32>
    %c0_3 = arith.constant 0 : index
    %c0_4 = arith.constant 0 : index
    %2 = vector.load %arg2[%c0_3, %c0_4] : memref<1x32xf32, #tpu.memory_space<vmem>>, vector<1x32xf32>
    %cst = arith.constant dense<0.000000e+00> : vector<8xf32>
    %3 = vector.multi_reduction <add>, %0, %cst [1] : vector<8x32xf32> to vector<8xf32>
    %4 = vector.shape_cast %3 : vector<8xf32> to vector<8x1xf32>
    %cst_5 = arith.constant 3.200000e+01 : f32
    %5 = vector.broadcast %cst_5 : f32 to vector<8x1xf32>
    %6 = arith.divf %4, %5 : vector<8x1xf32>
    %7 = vector.broadcast %6 : vector<8x1xf32> to vector<8x32xf32>
    %8 = arith.subf %0, %7 : vector<8x32xf32>
    %9 = arith.mulf %8, %8 : vector<8x32xf32>
    %cst_6 = arith.constant dense<0.000000e+00> : vector<8xf32>
    %10 = vector.multi_reduction <add>, %9, %cst_6 [1] : vector<8x32xf32> to vector<8xf32>
    %11 = vector.shape_cast %10 : vector<8xf32> to vector<8x1xf32>
    %cst_7 = arith.constant 3.200000e+01 : f32
    %12 = vector.broadcast %cst_7 : f32 to vector<8x1xf32>
    %13 = arith.divf %11, %12 : vector<8x1xf32>
    %14 = vector.broadcast %6 : vector<8x1xf32> to vector<8x32xf32>
    %15 = arith.subf %0, %14 : vector<8x32xf32>
    %cst_8 = arith.constant 9.99999974E-6 : f32
    %16 = vector.broadcast %cst_8 : f32 to vector<8x1xf32>
    %17 = arith.addf %13, %16 : vector<8x1xf32>
    %18 = math.rsqrt %17 : vector<8x1xf32>
    %19 = vector.broadcast %18 : vector<8x1xf32> to vector<8x32xf32>
    %20 = arith.mulf %15, %19 : vector<8x32xf32>
    %21 = vector.broadcast %1 : vector<1x32xf32> to vector<8x32xf32>
    %22 = arith.mulf %20, %21 : vector<8x32xf32>
    %23 = vector.broadcast %2 : vector<1x32xf32> to vector<8x32xf32>
    %24 = arith.addf %22, %23 : vector<8x32xf32>
    %25 = arith.truncf %24 : vector<8x32xf32> to vector<8x32xbf16>
    %c0_9 = arith.constant 0 : index
    %c0_10 = arith.constant 0 : index
    %26 = vector.load %arg3[%c0_9, %c0_10] : memref<32x128xf32, #tpu.memory_space<vmem>>, vector<32x128xf32>
    %27 = arith.truncf %26 : vector<32x128xf32> to vector<32x128xbf16>
    %cst_11 = arith.constant dense<0.000000e+00> : vector<8x128xf32>
    %28 = tpu.matmul %25, %27, %cst_11 {dimension_numbers = #tpu.dot_dimension_numbers<[1], [0], [0], [1], [0, 0, 1, 1], [], []>} : vector<8x32xbf16>, vector<32x128xbf16>, vector<8x128xf32> -> vector<8x128xf32>
    %c0_12 = arith.constant 0 : index
    %c0_13 = arith.constant 0 : index
    %29 = vector.load %arg4[%c0_12, %c0_13] : memref<8x128xf32, #tpu.memory_space<vmem>>, vector<8x128xf32>
    tpu.vector_store %arg4[%c0_12, %c0_13], %28 {strides = array<i32>} : memref<8x128xf32, #tpu.memory_space<vmem>>, vector<8x128xf32>,
    return
  }
}

</mosaic_0001>

<llo_original>
// kernel: image_encoder_wrapper_forward.4
$region0: #{image_encoder_wrapper_forward.4}
  #allocation0 [shape = 'u32[]', space=smem, size = 0x4, offset = 0x4, fixed_abs, tag = 'smem constant byte address 0x4 - core index']
  #allocation1 [shape = 'u32[144,128]{1,0:T(1,128)}', space=vmem, size = 0x12000, scoped, tag = 'internal scratch']
  #allocation2 [shape = 'f32[32,128]{1,0:T(8,128)}', space=vmem, size = 0x4000, scoped, tag = 'scratch operand']
  %s0 = inlined_call_operand.vmem [shape: f32[32,128], index: 0, kind: input, shape index: {}]
  %s1 = inlined_call_operand.vmem [shape: f32[128,128], index: 1, kind: input, shape index: {}]
  %s2 = inlined_call_operand.vmem [shape: f32[32,128], index: 2, kind: output, shape index: {}]
  %s3 = sld [smem:[#allocation0]]
  $region26: #{image_encoder_wrapper_forward.4} parent=0
    _
  %s5 = ssub.s32 1, %s3
  %s6 = scalar_select 0, %s5, %s3
  // Predicated region
  $region2: #{image_encoder_wrapper_forward.4} parent=0 // pred_check
    _
  $region3: #{image_encoder_wrapper_forward.4} parent=0 // pred_check_branch
    %8 = sbr.rel (0) target = $region5
  $region4: #{image_encoder_wrapper_forward.4} parent=0 // pred_region
    _
  $region5: #{image_encoder_wrapper_forward.4} parent=0 // pred_fallthru
    _
  // Predicated region
  $region6: #{image_encoder_wrapper_forward.4} parent=0 // pred_check
    _
  $region7: #{image_encoder_wrapper_forward.4} parent=0 // pred_check_branch
    %10 = sbr.rel (0) target = $region9
  $region8: #{image_encoder_wrapper_forward.4} parent=0 // pred_region
    _
  $region9: #{image_encoder_wrapper_forward.4} parent=0 // pred_fallthru
    _
  %p12 = scmp.eq.s32.totalorder 0, 0
  // Predicated region
  $region10: #{image_encoder_wrapper_forward.4} parent=0 // pred_check
    %p13 = pneg %p12
  $region11: #{image_encoder_wrapper_forward.4} parent=0 // pred_check_branch
    %15 = sbr.rel (%p13) target = $region13
  $region12: #{image_encoder_wrapper_forward.4} parent=0 // pred_region
    %16 = vst [vmem:[#allocation2] sm:$0xff] 0.0
    %17 = vst [vmem:[#allocation2 + $0x8] sm:$0xff] 0.0
    %18 = vst [vmem:[#allocation2 + $0x10] sm:$0xff] 0.0
    %19 = vst [vmem:[#allocation2 + $0x18] sm:$0xff] 0.0
  $region13: #{image_encoder_wrapper_forward.4} parent=0 // pred_fallthru
    _
  %v20 = vld [vmem:[#allocation2] sm:$0xff]
  %v21 = vld [vmem:[#allocation2 + $0x8] sm:$0xff]
  %v22 = vld [vmem:[#allocation2 + $0x10] sm:$0xff]
  %v23 = vld [vmem:[#allocation2 + $0x18] sm:$0xff]
  %v24 = vld [vmem:[%s0] sm:$0xff]
  %v25 = vld [vmem:[%s0 + $0x8] sm:$0xff]
  %v26 = vld [vmem:[%s0 + $0x10] sm:$0xff]
  %v27 = vld [vmem:[%s0 + $0x18] sm:$0xff]
  %v28 = vpack.c.bf16 %v25, %v24
  %v29 = vpack.c.bf16 %v27, %v26
  %v30 = vld [vmem:[%s1] sm:$0xff]
  %v31 = vld [vmem:[%s1 + $0x8] sm:$0xff]
  %v32 = vld [vmem:[%s1 + $0x10] sm:$0xff]
  %v33 = vld [vmem:[%s1 + $0x18] sm:$0xff]
  %v34 = vld [vmem:[%s1 + $0x20] sm:$0xff]
  %v35 = vld [vmem:[%s1 + $0x28] sm:$0xff]
  %v36 = vld [vmem:[%s1 + $0x30] sm:$0xff]
  %v37 = vld [vmem:[%s1 + $0x38] sm:$0xff]
  %v38 = vld [vmem:[%s1 + $0x40] sm:$0xff]
  %v39 = vld [vmem:[%s1 + $0x48] sm:$0xff]
  %v40 = vld [vmem:[%s1 + $0x50] sm:$0xff]
  %v41 = vld [vmem:[%s1 + $0x58] sm:$0xff]
  %v42 = vld [vmem:[%s1 + $0x60] sm:$0xff]
  %v43 = vld [vmem:[%s1 + $0x68] sm:$0xff]
  %v44 = vld [vmem:[%s1 + $0x70] sm:$0xff]
  %v45 = vld [vmem:[%s1 + $0x78] sm:$0xff]
  %v46 = vpack.c.bf16 %v31, %v30
  %v47 = vpack.c.bf16 %v33, %v32
  %v48 = vpack.c.bf16 %v35, %v34
  %v49 = vpack.c.bf16 %v37, %v36
  %v50 = vpack.c.bf16 %v39, %v38
  %v51 = vpack.c.bf16 %v41, %v40
  %v52 = vpack.c.bf16 %v43, %v42
  %v53 = vpack.c.bf16 %v45, %v44
  %54 = vmatprep.subr.bf16.mxu0 0
  %55 = vmatpush1.bf16.msra.mxu0 %v46
  %56 = vmatprep.subr.bf16.mxu0 0
  %57 = vmatpush1.bf16.msra.mxu0 %v47
  %58 = vmatprep.subr.bf16.mxu0 0
  %59 = vmatpush1.bf16.msra.mxu0 %v48
  %60 = vmatprep.subr.bf16.mxu0 0
  %61 = vmatpush1.bf16.msra.mxu0 %v49
  %62 = vmatprep.subr.bf16.mxu0 0
  %63 = vmatpush1.bf16.msra.mxu0 %v50
  %64 = vmatprep.subr.bf16.mxu0 0
  %65 = vmatpush1.bf16.msra.mxu0 %v51
  %66 = vmatprep.subr.bf16.mxu0 0
  %67 = vmatpush1.bf16.msra.mxu0 %v52
  %68 = vmatprep.subr.bf16.mxu0 0
  %69 = vmatpush1.bf16.msra.mxu0 %v53
  %70 = vmatprep.subr.bf16.mxu0 0
  %71 = vmatpush1.bf16.msra.mxu0 0
  %72 = vmatprep.subr.bf16.mxu0 0
  %73 = vmatpush1.bf16.msra.mxu0 0
  %74 = vmatprep.subr.bf16.mxu0 0
  %75 = vmatpush1.bf16.msra.mxu0 0
  %76 = vmatprep.subr.bf16.mxu0 0
  %77 = vmatpush1.bf16.msra.mxu0 0
  %78 = vmatprep.subr.bf16.mxu0 0
  %79 = vmatpush1.bf16.msra.mxu0 0
  %80 = vmatprep.subr.bf16.mxu0 0
  %81 = vmatpush1.bf16.msra.mxu0 0
  %82 = vmatprep.subr.bf16.mxu0 0
  %83 = vmatpush1.bf16.msra.mxu0 0
  %84 = vmatprep.subr.bf16.mxu0 0
  %85 = vmatpush1.bf16.msra.mxu0 0
  %86 = vmatprep.mubr.bf16.mxu0 0
  %87 = vmatmul.mubr.bf16.gmra.mrb[0].mxu0 %v28
  %v88 = vpop.f32.mrb[0].mxu0
  %v89 = vadd.f32 0.0, %v88
  %v90 = vpop.f32.mrb[0].mxu0
  %v91 = vpop.f32.mrb[0].mxu0
  %v92 = vadd.f32 0.0, %v91
  %v93 = vpop.f32.mrb[0].mxu0
  %94 = vmatprep.mubr.bf16.mxu0 0
  %95 = vmatmul.mubr.bf16.gmra.mrb[0].mxu0 %v29
  %v96 = vpop.f32.mrb[0].mxu0
  %v97 = vadd.f32 0.0, %v96
  %v98 = vpop.f32.mrb[0].mxu0
  %v99 = vpop.f32.mrb[0].mxu0
  %v100 = vadd.f32 0.0, %v99
  %v101 = vpop.f32.mrb[0].mxu0
  %102 = vdwg.mxu0
  %v103 = vadd.f32 %v20, %v89
  %v104 = vadd.f32 %v21, %v92
  %v105 = vadd.f32 %v22, %v97
  %v106 = vadd.f32 %v23, %v100
  %107 = vst [vmem:[#allocation2] sm:$0xff] %v103
  %108 = vst [vmem:[#allocation2 + $0x8] sm:$0xff] %v104
  %109 = vst [vmem:[#allocation2 + $0x10] sm:$0xff] %v105
  %110 = vst [vmem:[#allocation2 + $0x18] sm:$0xff] %v106
  // Predicated region
  $region14: #{image_encoder_wrapper_forward.4} parent=0 // pred_check
    %p111 = pneg %p12
  $region15: #{image_encoder_wrapper_forward.4} parent=0 // pred_check_branch
    %113 = sbr.rel (%p111) target = $region17
  $region16: #{image_encoder_wrapper_forward.4} parent=0 // pred_region
    %v114 = vld [vmem:[#allocation2] sm:$0xff]
    %v115 = vld [vmem:[#allocation2 + $0x8] sm:$0xff]
    %v116 = vld [vmem:[#allocation2 + $0x10] sm:$0xff]
    %v117 = vld [vmem:[#allocation2 + $0x18] sm:$0xff]
    %118 = vst [vmem:[%s2] sm:$0xff] %v114
    %119 = vst [vmem:[%s2 + $0x8] sm:$0xff] %v115
    %120 = vst [vmem:[%s2 + $0x10] sm:$0xff] %v116
    %121 = vst [vmem:[%s2 + $0x18] sm:$0xff] %v117
  $region17: #{image_encoder_wrapper_forward.4} parent=0 // pred_fallthru
    _
  // Predicated region
  $region18: #{image_encoder_wrapper_forward.4} parent=0 // pred_check
    _
  $region19: #{image_encoder_wrapper_forward.4} parent=0 // pred_check_branch
    %123 = sbr.rel (0) target = $region21
  $region20: #{image_encoder_wrapper_forward.4} parent=0 // pred_region
    _
  $region21: #{image_encoder_wrapper_forward.4} parent=0 // pred_fallthru
    _
  // Predicated region
  $region22: #{image_encoder_wrapper_forward.4} parent=0 // pred_check
    _
  $region23: #{image_encoder_wrapper_forward.4} parent=0 // pred_check_branch
    %125 = sbr.rel (0) target = $region25
  $region24: #{image_encoder_wrapper_forward.4} parent=0 // pred_region
    _
  $region25: #{image_encoder_wrapper_forward.4} parent=0 // pred_fallthru
    _

// kernel: image_encoder_wrapper_forward.7
$region0: #{image_encoder_wrapper_forward.7}
  #allocation0 [shape = 'u32[]', space=smem, size = 0x4, offset = 0x4, fixed_abs, tag = 'smem constant byte address 0x4 - core index']
  #allocation1 [shape = 'u32[144,128]{1,0:T(1,128)}', space=vmem, size = 0x12000, scoped, tag = 'internal scratch']
  %s0 = inlined_call_operand.vmem [shape: f32[8,32], index: 0, kind: input, shape index: {}]
  %s1 = inlined_call_operand.vmem [shape: f32[1,32], index: 1, kind: input, shape index: {}]
  %s2 = inlined_call_operand.vmem [shape: f32[1,32], index: 2, kind: input, shape index: {}]
  %s3 = inlined_call_operand.vmem [shape: f32[32,128], index: 3, kind: input, shape index: {}]
  %s4 = inlined_call_operand.vmem [shape: f32[8,128], index: 4, kind: output, shape index: {}]
  %s5 = sld [smem:[#allocation0]]
  $region26: #{image_encoder_wrapper_forward.7} parent=0
    _
  %s7 = ssub.s32 1, %s5
  %s8 = scalar_select 0, %s7, %s5
  // Predicated region
  $region2: #{image_encoder_wrapper_forward.7} parent=0 // pred_check
    _
  $region3: #{image_encoder_wrapper_forward.7} parent=0 // pred_check_branch
    %10 = sbr.rel (0) target = $region5
  $region4: #{image_encoder_wrapper_forward.7} parent=0 // pred_region
    _
  $region5: #{image_encoder_wrapper_forward.7} parent=0 // pred_fallthru
    _
  // Predicated region
  $region6: #{image_encoder_wrapper_forward.7} parent=0 // pred_check
    _
  $region7: #{image_encoder_wrapper_forward.7} parent=0 // pred_check_branch
    %12 = sbr.rel (0) target = $region9
  $region8: #{image_encoder_wrapper_forward.7} parent=0 // pred_region
    _
  $region9: #{image_encoder_wrapper_forward.7} parent=0 // pred_fallthru
    _
  // Predicated region
  $region10: #{image_encoder_wrapper_forward.7} parent=0 // pred_check
    _
  $region11: #{image_encoder_wrapper_forward.7} parent=0 // pred_check_branch
    %14 = sbr.rel (0) target = $region13
  $region12: #{image_encoder_wrapper_forward.7} parent=0 // pred_region
    _
  $region13: #{image_encoder_wrapper_forward.7} parent=0 // pred_fallthru
    _
  // Predicated region
  $region14: #{image_encoder_wrapper_forward.7} parent=0 // pred_check
    _
  $region15: #{image_encoder_wrapper_forward.7} parent=0 // pred_check_branch
    %16 = sbr.rel (0) target = $region17
  $region16: #{image_encoder_wrapper_forward.7} parent=0 // pred_region
    _
  $region17: #{image_encoder_wrapper_forward.7} parent=0 // pred_fallthru
    _
  %v18 = vld [vmem:[%s0] sm:$0xff]
  %v19 = vld [vmem:[%s1] sm:$0x1]
  %v20 = vld [vmem:[%s2] sm:$0x1]
  %vm21 = vcmask 261120
  %v22 = vsel %vm21, %v18, 0.0
  %23 = vadd.xlane.f32.xlu0 %v22
  %v24 = vpop.xlane.xlu0 %23
  %v25 = vrcp.pop 32.0
  %v26 = vmul.f32 %v24, %v25
  %v27 = vsub.f32 %v18, %v26
  %v28 = vmul.f32 %v27, %v27
  %v29 = vsel %vm21, %v28, 0.0
  %30 = vadd.xlane.f32.xlu0 %v29
  %v31 = vpop.xlane.xlu0 %30
  %v32 = vmul.f32 %v31, %v25
  %v33 = vadd.f32 %v32, 1e-05
  %v34 = vrsqrt.pop %v33
  %v35 = vmul.f32 %v27, %v34
  %v37 = vlaneseq
  %v38 = vshrl.u32 %v37, 7
  %v39 = vsub.s32 0, %v38
  %v40 = vrot.slane %v19, %v39
  %v42 = vmul.f32 %v35, %v40
  %v44 = vlaneseq
  %v45 = vshrl.u32 %v44, 7
  %v46 = vsub.s32 0, %v45
  %v47 = vrot.slane %v20, %v46
  %v49 = vadd.f32 %v42, %v47
  %v50 = vpack.c.bf16 %v49, %v49
  %v51 = vld [vmem:[%s3] sm:$0xff]
  %v52 = vld [vmem:[%s3 + $0x8] sm:$0xff]
  %v53 = vld [vmem:[%s3 + $0x10] sm:$0xff]
  %v54 = vld [vmem:[%s3 + $0x18] sm:$0xff]
  %v55 = vpack.c.bf16 %v52, %v51
  %v56 = vpack.c.bf16 %v54, %v53
  %v58 = vsel %vm21, %v50, 0
  %60 = vmatprep.subr.bf16.mxu0 0
  %61 = vmatpush1.bf16.msra.mxu0 %v55
  %62 = vmatprep.subr.bf16.mxu0 0
  %63 = vmatpush1.bf16.msra.mxu0 %v56
  %64 = vmatprep.subr.bf16.mxu0 0
  %65 = vmatpush1.bf16.msra.mxu0 0
  %66 = vmatprep.subr.bf16.mxu0 0
  %67 = vmatpush1.bf16.msra.mxu0 0
  %68 = vmatprep.subr.bf16.mxu0 0
  %69 = vmatpush1.bf16.msra.mxu0 0
  %70 = vmatprep.subr.bf16.mxu0 0
  %71 = vmatpush1.bf16.msra.mxu0 0
  %72 = vmatprep.subr.bf16.mxu0 0
  %73 = vmatpush1.bf16.msra.mxu0 0
  %74 = vmatprep.subr.bf16.mxu0 0
  %75 = vmatpush1.bf16.msra.mxu0 0
  %76 = vmatprep.subr.bf16.mxu0 0
  %77 = vmatpush1.bf16.msra.mxu0 0
  %78 = vmatprep.subr.bf16.mxu0 0
  %79 = vmatpush1.bf16.msra.mxu0 0
  %80 = vmatprep.subr.bf16.mxu0 0
  %81 = vmatpush1.bf16.msra.mxu0 0
  %82 = vmatprep.subr.bf16.mxu0 0
  %83 = vmatpush1.bf16.msra.mxu0 0
  %84 = vmatprep.subr.bf16.mxu0 0
  %85 = vmatpush1.bf16.msra.mxu0 0
  %86 = vmatprep.subr.bf16.mxu0 0
  %87 = vmatpush1.bf16.msra.mxu0 0
  %88 = vmatprep.subr.bf16.mxu0 0
  %89 = vmatpush1.bf16.msra.mxu0 0
  %90 = vmatprep.subr.bf16.mxu0 0
  %91 = vmatpush1.bf16.msra.mxu0 0
  %92 = vmatprep.mubr.bf16.mxu0 0
  %93 = vmatmul.mubr.bf16.gmra.mrb[0].mxu0 %v58
  %v94 = vpop.f32.mrb[0].mxu0
  %v95 = vadd.f32 0.0, %v94
  %v96 = vpop.f32.mrb[0].mxu0
  %v97 = vpop.f32.mrb[0].mxu0
  %v98 = vpop.f32.mrb[0].mxu0
  %99 = vdwg.mxu0
  %100 = vst [vmem:[%s4] sm:$0xff] %v95
  // Predicated region
  $region18: #{image_encoder_wrapper_forward.7} parent=0 // pred_check
    _
  $region19: #{image_encoder_wrapper_forward.7} parent=0 // pred_check_branch
    %102 = sbr.rel (0) target = $region21
  $region20: #{image_encoder_wrapper_forward.7} parent=0 // pred_region
    _
  $region21: #{image_encoder_wrapper_forward.7} parent=0 // pred_fallthru
    _
  // Predicated region
  $region22: #{image_encoder_wrapper_forward.7} parent=0 // pred_check
    _
  $region23: #{image_encoder_wrapper_forward.7} parent=0 // pred_check_branch
    %104 = sbr.rel (0) target = $region25
  $region24: #{image_encoder_wrapper_forward.7} parent=0 // pred_region
    _
  $region25: #{image_encoder_wrapper_forward.7} parent=0 // pred_fallthru
    _

// kernel: image_encoder_wrapper_forward.6
$region0: #{image_encoder_wrapper_forward.6}
  #allocation0 [shape = 'u32[]', space=smem, size = 0x4, offset = 0x4, fixed_abs, tag = 'smem constant byte address 0x4 - core index']
  #allocation1 [shape = 'u32[144,128]{1,0:T(1,128)}', space=vmem, size = 0x12000, scoped, tag = 'internal scratch']
  %s0 = inlined_call_operand.vmem [shape: f32[48,32], index: 0, kind: input, shape index: {}]
  %s1 = inlined_call_operand.vmem [shape: f32[1,32], index: 1, kind: input, shape index: {}]
  %s2 = inlined_call_operand.vmem [shape: f32[1,32], index: 2, kind: input, shape index: {}]
  %s3 = inlined_call_operand.vmem [shape: f32[32,128], index: 3, kind: input, shape index: {}]
  %s4 = inlined_call_operand.vmem [shape: f32[1,128], index: 4, kind: input, shape index: {}]
  %s5 = inlined_call_operand.vmem [shape: f32[128,32], index: 5, kind: input, shape index: {}]
  %s6 = inlined_call_operand.vmem [shape: f32[1,32], index: 6, kind: input, shape index: {}]
  %s7 = inlined_call_operand.vmem [shape: f32[48,32], index: 7, kind: output, shape index: {}]
  %s8 = sld [smem:[#allocation0]]
  $region38: #{image_encoder_wrapper_forward.6} parent=0
    _
  %s10 = ssub.s32 1, %s8
  %s11 = scalar_select 0, %s10, %s8
  // Predicated region
  $region2: #{image_encoder_wrapper_forward.6} parent=0 // pred_check
    _
  $region3: #{image_encoder_wrapper_forward.6} parent=0 // pred_check_branch
    %13 = sbr.rel (0) target = $region5
  $region4: #{image_encoder_wrapper_forward.6} parent=0 // pred_region
    _
  $region5: #{image_encoder_wrapper_forward.6} parent=0 // pred_fallthru
    _
  // Predicated region
  $region6: #{image_encoder_wrapper_forward.6} parent=0 // pred_check
    _
  $region7: #{image_encoder_wrapper_forward.6} parent=0 // pred_check_branch
    %15 = sbr.rel (0) target = $region9
  $region8: #{image_encoder_wrapper_forward.6} parent=0 // pred_region
    _
  $region9: #{image_encoder_wrapper_forward.6} parent=0 // pred_fallthru
    _
  // Predicated region
  $region10: #{image_encoder_wrapper_forward.6} parent=0 // pred_check
    _
  $region11: #{image_encoder_wrapper_forward.6} parent=0 // pred_check_branch
    %17 = sbr.rel (0) target = $region13
  $region12: #{image_encoder_wrapper_forward.6} parent=0 // pred_region
    _
  $region13: #{image_encoder_wrapper_forward.6} parent=0 // pred_fallthru
    _
  // Predicated region
  $region14: #{image_encoder_wrapper_forward.6} parent=0 // pred_check
    _
  $region15: #{image_encoder_wrapper_forward.6} parent=0 // pred_check_branch
    %19 = sbr.rel (0) target = $region17
  $region16: #{image_encoder_wrapper_forward.6} parent=0 // pred_region
    _
  $region17: #{image_encoder_wrapper_forward.6} parent=0 // pred_fallthru
    _
  // Predicated region
  $region18: #{image_encoder_wrapper_forward.6} parent=0 // pred_check
    _
  $region19: #{image_encoder_wrapper_forward.6} parent=0 // pred_check_branch
    %21 = sbr.rel (0) target = $region21
  $region20: #{image_encoder_wrapper_forward.6} parent=0 // pred_region
    _
  $region21: #{image_encoder_wrapper_forward.6} parent=0 // pred_fallthru
    _
  // Predicated region
  $region22: #{image_encoder_wrapper_forward.6} parent=0 // pred_check
    _
  $region23: #{image_encoder_wrapper_forward.6} parent=0 // pred_check_branch
    %23 = sbr.rel (0) target = $region25
  $region24: #{image_encoder_wrapper_forward.6} parent=0 // pred_region
    _
  $region25: #{image_encoder_wrapper_forward.6} parent=0 // pred_fallthru
    _
  // Predicated region
  $region26: #{image_encoder_wrapper_forward.6} parent=0 // pred_check
    _
  $region27: #{image_encoder_wrapper_forward.6} parent=0 // pred_check_branch
    %25 = sbr.rel (0) target = $region29
  $region28: #{image_encoder_wrapper_forward.6} parent=0 // pred_region
    _
  $region29: #{image_encoder_wrapper_forward.6} parent=0 // pred_fallthru
    _
  %v27 = vld [vmem:[%s0] sm:$0xff]
  %v28 = vld [vmem:[%s0 + $0x8] sm:$0xff]
  %v29 = vld [vmem:[%s0 + $0x10] sm:$0xff]
  %v30 = vld [vmem:[%s0 + $0x18] sm:$0xff]
  %v31 = vld [vmem:[%s0 + $0x20] sm:$0xff]
  %v32 = vld [vmem:[%s0 + $0x28] sm:$0xff]
  %v33 = vld [vmem:[%s1] sm:$0x1]
  %v34 = vld [vmem:[%s2] sm:$0x1]
  %vm35 = vcmask 261120
  %v36 = vsel %vm35, %v27, 0.0
  %37 = vadd.xlane.f32.xlu0 %v36
  %v38 = vpop.xlane.xlu0 %37
  %v39 = vsel %vm35, %v28, 0.0
  %40 = vadd.xlane.f32.xlu0 %v39
  %v41 = vpop.xlane.xlu0 %40
  %v42 = vsel %vm35, %v29, 0.0
  %43 = vadd.xlane.f32.xlu0 %v42
  %v44 = vpop.xlane.xlu0 %43
  %v45 = vsel %vm35, %v30, 0.0
  %46 = vadd.xlane.f32.xlu0 %v45
  %v47 = vpop.xlane.xlu0 %46
  %v48 = vsel %vm35, %v31, 0.0
  %49 = vadd.xlane.f32.xlu0 %v48
  %v50 = vpop.xlane.xlu0 %49
  %v51 = vsel %vm35, %v32, 0.0
  %52 = vadd.xlane.f32.xlu0 %v51
  %v53 = vpop.xlane.xlu0 %52
  %v54 = vrcp.pop 32.0
  %v55 = vmul.f32 %v38, %v54
  %v56 = vmul.f32 %v41, %v54
  %v57 = vmul.f32 %v44, %v54
  %v58 = vmul.f32 %v47, %v54
  %v59 = vmul.f32 %v50, %v54
  %v60 = vmul.f32 %v53, %v54
  %v61 = vsub.f32 %v27, %v55
  %v62 = vsub.f32 %v28, %v56
  %v63 = vsub.f32 %v29, %v57
  %v64 = vsub.f32 %v30, %v58
  %v65 = vsub.f32 %v31, %v59
  %v66 = vsub.f32 %v32, %v60
  %v67 = vmul.f32 %v61, %v61
  %v68 = vmul.f32 %v62, %v62
  %v69 = vmul.f32 %v63, %v63
  %v70 = vmul.f32 %v64, %v64
  %v71 = vmul.f32 %v65, %v65
  %v72 = vmul.f32 %v66, %v66
  %v73 = vsel %vm35, %v67, 0.0
  %74 = vadd.xlane.f32.xlu0 %v73
  %v75 = vpop.xlane.xlu0 %74
  %v76 = vsel %vm35, %v68, 0.0
  %77 = vadd.xlane.f32.xlu0 %v76
  %v78 = vpop.xlane.xlu0 %77
  %v79 = vsel %vm35, %v69, 0.0
  %80 = vadd.xlane.f32.xlu0 %v79
  %v81 = vpop.xlane.xlu0 %80
  %v82 = vsel %vm35, %v70, 0.0
  %83 = vadd.xlane.f32.xlu0 %v82
  %v84 = vpop.xlane.xlu0 %83
  %v85 = vsel %vm35, %v71, 0.0
  %86 = vadd.xlane.f32.xlu0 %v85
  %v87 = vpop.xlane.xlu0 %86
  %v88 = vsel %vm35, %v72, 0.0
  %89 = vadd.xlane.f32.xlu0 %v88
  %v90 = vpop.xlane.xlu0 %89
  %v91 = vmul.f32 %v75, %v54
  %v92 = vmul.f32 %v78, %v54
  %v93 = vmul.f32 %v81, %v54
  %v94 = vmul.f32 %v84, %v54
  %v95 = vmul.f32 %v87, %v54
  %v96 = vmul.f32 %v90, %v54
  %v97 = vadd.f32 %v91, 1e-05
  %v98 = vadd.f32 %v92, 1e-05
  %v99 = vadd.f32 %v93, 1e-05
  %v100 = vadd.f32 %v94, 1e-05
  %v101 = vadd.f32 %v95, 1e-05
  %v102 = vadd.f32 %v96, 1e-05
  %v103 = vrsqrt.pop %v97
  %v104 = vrsqrt.pop %v98
  %v105 = vrsqrt.pop %v99
  %v106 = vrsqrt.pop %v100
  %v107 = vrsqrt.pop %v101
  %v108 = vrsqrt.pop %v102
  %v109 = vmul.f32 %v61, %v103
  %v110 = vmul.f32 %v62, %v104
  %v111 = vmul.f32 %v63, %v105
  %v112 = vmul.f32 %v64, %v106
  %v113 = vmul.f32 %v65, %v107
  %v114 = vmul.f32 %v66, %v108
  %v116 = vlaneseq
  %v117 = vshrl.u32 %v116, 7
  %v118 = vsub.s32 0, %v117
  %v119 = vrot.slane %v33, %v118
  %v121 = vmul.f32 %v109, %v119
  %v122 = vmul.f32 %v110, %v119
  %v123 = vmul.f32 %v111, %v119
  %v124 = vmul.f32 %v112, %v119
  %v125 = vmul.f32 %v113, %v119
  %v126 = vmul.f32 %v114, %v119
  %v128 = vlaneseq
  %v129 = vshrl.u32 %v128, 7
  %v130 = vsub.s32 0, %v129
  %v131 = vrot.slane %v34, %v130
  %v133 = vadd.f32 %v121, %v131
  %v134 = vadd.f32 %v122, %v131
  %v135 = vadd.f32 %v123, %v131
  %v136 = vadd.f32 %v124, %v131
  %v137 = vadd.f32 %v125, %v131
  %v138 = vadd.f32 %v126, %v131
  %v139 = vpack.c.bf16 %v134, %v133
  %v140 = vpack.c.bf16 %v136, %v135
  %v141 = vpack.c.bf16 %v138, %v137
  %v142 = vld [vmem:[%s3] sm:$0xff]
  %v143 = vld [vmem:[%s3 + $0x8] sm:$0xff]
  %v144 = vld [vmem:[%s3 + $0x10] sm:$0xff]
  %v145 = vld [vmem:[%s3 + $0x18] sm:$0xff]
  %v146 = vpack.c.bf16 %v143, %v142
  %v147 = vpack.c.bf16 %v145, %v144
  %v148 = vld [vmem:[%s4] sm:$0x1]
  %v150 = vlaneseq
  %v151 = vshrl.u32 %v150, 7
  %v152 = vsub.s32 0, %v151
  %v153 = vrot.slane %v148, %v152
  %v156 = vsel %vm35, %v139, 0
  %v159 = vsel %vm35, %v140, 0
  %v162 = vsel %vm35, %v141, 0
  %164 = vmatprep.subr.bf16.mxu0 0
  %165 = vmatpush1.bf16.msra.mxu0 %v146
  %166 = vmatprep.subr.bf16.mxu0 0
  %167 = vmatpush1.bf16.msra.mxu0 %v147
  %168 = vmatprep.subr.bf16.mxu0 0
  %169 = vmatpush1.bf16.msra.mxu0 0
  %170 = vmatprep.subr.bf16.mxu0 0
  %171 = vmatpush1.bf16.msra.mxu0 0
  %172 = vmatprep.subr.bf16.mxu0 0
  %173 = vmatpush1.bf16.msra.mxu0 0
  %174 = vmatprep.subr.bf16.mxu0 0
  %175 = vmatpush1.bf16.msra.mxu0 0
  %176 = vmatprep.subr.bf16.mxu0 0
  %177 = vmatpush1.bf16.msra.mxu0 0
  %178 = vmatprep.subr.bf16.mxu0 0
  %179 = vmatpush1.bf16.msra.mxu0 0
  %180 = vmatprep.subr.bf16.mxu0 0
  %181 = vmatpush1.bf16.msra.mxu0 0
  %182 = vmatprep.subr.bf16.mxu0 0
  %183 = vmatpush1.bf16.msra.mxu0 0
  %184 = vmatprep.subr.bf16.mxu0 0
  %185 = vmatpush1.bf16.msra.mxu0 0
  %186 = vmatprep.subr.bf16.mxu0 0
  %187 = vmatpush1.bf16.msra.mxu0 0
  %188 = vmatprep.subr.bf16.mxu0 0
  %189 = vmatpush1.bf16.msra.mxu0 0
  %190 = vmatprep.subr.bf16.mxu0 0
  %191 = vmatpush1.bf16.msra.mxu0 0
  %192 = vmatprep.subr.bf16.mxu0 0
  %193 = vmatpush1.bf16.msra.mxu0 0
  %194 = vmatprep.subr.bf16.mxu0 0
  %195 = vmatpush1.bf16.msra.mxu0 0
  %196 = vmatprep.mubr.bf16.mxu0 0
  %197 = vmatmul.mubr.bf16.gmra.mrb[0].mxu0 %v156
  %v198 = vpop.f32.mrb[0].mxu0
  %v199 = vadd.f32 %v153, %v198
  %v200 = vpop.f32.mrb[0].mxu0
  %v201 = vpop.f32.mrb[0].mxu0
  %v202 = vadd.f32 %v153, %v201
  %v203 = vpop.f32.mrb[0].mxu0
  %204 = vmatprep.mubr.bf16.mxu0 0
  %205 = vmatmul.mubr.bf16.gmra.mrb[0].mxu0 %v159
  %v206 = vpop.f32.mrb[0].mxu0
  %v207 = vadd.f32 %v153, %v206
  %v208 = vpop.f32.mrb[0].mxu0
  %v209 = vpop.f32.mrb[0].mxu0
  %v210 = vadd.f32 %v153, %v209
  %v211 = vpop.f32.mrb[0].mxu0
  %212 = vmatprep.mubr.bf16.mxu0 0
  %213 = vmatmul.mubr.bf16.gmra.mrb[0].mxu0 %v162
  %v214 = vpop.f32.mrb[0].mxu0
  %v215 = vadd.f32 %v153, %v214
  %v216 = vpop.f32.mrb[0].mxu0
  %v217 = vpop.f32.mrb[0].mxu0
  %v218 = vadd.f32 %v153, %v217
  %v219 = vpop.f32.mrb[0].mxu0
  %220 = vdwg.mxu0
  %v221 = vmul.f32 %v199, 1.702
  %v222 = vmul.f32 %v202, 1.702
  %v223 = vmul.f32 %v207, 1.702
  %v224 = vmul.f32 %v210, 1.702
  %v225 = vmul.f32 %v215, 1.702
  %v226 = vmul.f32 %v218, 1.702
  %v227 = vxor.u32 %v221, 2147483648
  %v228 = vxor.u32 %v222, 2147483648
  %v229 = vxor.u32 %v223, 2147483648
  %v230 = vxor.u32 %v224, 2147483648
  %v231 = vxor.u32 %v225, 2147483648
  %v232 = vxor.u32 %v226, 2147483648
  %v233 = vmul.f32 %v227, 1.442695
  %v234 = vpow.pop %v233
  %v235 = vmul.f32 %v228, 1.442695
  %v236 = vpow.pop %v235
  %v237 = vmul.f32 %v229, 1.442695
  %v238 = vpow.pop %v237
  %v239 = vmul.f32 %v230, 1.442695
  %v240 = vpow.pop %v239
  %v241 = vmul.f32 %v231, 1.442695
  %v242 = vpow.pop %v241
  %v243 = vmul.f32 %v232, 1.442695
  %v244 = vpow.pop %v243
  %v245 = vadd.f32 %v234, 1.0
  %v246 = vadd.f32 %v236, 1.0
  %v247 = vadd.f32 %v238, 1.0
  %v248 = vadd.f32 %v240, 1.0
  %v249 = vadd.f32 %v242, 1.0
  %v250 = vadd.f32 %v244, 1.0
  %v251 = vrcp.pop %v245
  %v252 = vmul.f32 1.0, %v251
  %v253 = vrcp.pop %v246
  %v254 = vmul.f32 1.0, %v253
  %v255 = vrcp.pop %v247
  %v256 = vmul.f32 1.0, %v255
  %v257 = vrcp.pop %v248
  %v258 = vmul.f32 1.0, %v257
  %v259 = vrcp.pop %v249
  %v260 = vmul.f32 1.0, %v259
  %v261 = vrcp.pop %v250
  %v262 = vmul.f32 1.0, %v261
  %v263 = vmul.f32 %v199, %v252
  %v264 = vmul.f32 %v202, %v254
  %v265 = vmul.f32 %v207, %v256
  %v266 = vmul.f32 %v210, %v258
  %v267 = vmul.f32 %v215, %v260
  %v268 = vmul.f32 %v218, %v262
  %v269 = vpack.c.bf16 %v264, %v263
  %v270 = vpack.c.bf16 %v266, %v265
  %v271 = vpack.c.bf16 %v268, %v267
  %v272 = vld [vmem:[%s5] sm:$0xff]
  %v273 = vld [vmem:[%s5 + $0x8] sm:$0xff]
  %v274 = vld [vmem:[%s5 + $0x10] sm:$0xff]
  %v275 = vld [vmem:[%s5 + $0x18] sm:$0xff]
  %v276 = vld [vmem:[%s5 + $0x20] sm:$0xff]
  %v277 = vld [vmem:[%s5 + $0x28] sm:$0xff]
  %v278 = vld [vmem:[%s5 + $0x30] sm:$0xff]
  %v279 = vld [vmem:[%s5 + $0x38] sm:$0xff]
  %v280 = vld [vmem:[%s5 + $0x40] sm:$0xff]
  %v281 = vld [vmem:[%s5 + $0x48] sm:$0xff]
  %v282 = vld [vmem:[%s5 + $0x50] sm:$0xff]
  %v283 = vld [vmem:[%s5 + $0x58] sm:$0xff]
  %v284 = vld [vmem:[%s5 + $0x60] sm:$0xff]
  %v285 = vld [vmem:[%s5 + $0x68] sm:$0xff]
  %v286 = vld [vmem:[%s5 + $0x70] sm:$0xff]
  %v287 = vld [vmem:[%s5 + $0x78] sm:$0xff]
  %v288 = vpack.c.bf16 %v273, %v272
  %v289 = vpack.c.bf16 %v275, %v274
  %v290 = vpack.c.bf16 %v277, %v276
  %v291 = vpack.c.bf16 %v279, %v278
  %v292 = vpack.c.bf16 %v281, %v280
  %v293 = vpack.c.bf16 %v283, %v282
  %v294 = vpack.c.bf16 %v285, %v284
  %v295 = vpack.c.bf16 %v287, %v286
  %v296 = vld [vmem:[%s6] sm:$0x1]
  %v298 = vlaneseq
  %v299 = vshrl.u32 %v298, 7
  %v300 = vsub.s32 0, %v299
  %v301 = vrot.slane %v296, %v300
  %303 = vmatprep.subr.bf16.mxu0 0
  %304 = vmatpush1.bf16.msra.mxu0 %v288
  %305 = vmatprep.subr.bf16.mxu0 0
  %306 = vmatpush1.bf16.msra.mxu0 %v289
  %307 = vmatprep.subr.bf16.mxu0 0
  %308 = vmatpush1.bf16.msra.mxu0 %v290
  %309 = vmatprep.subr.bf16.mxu0 0
  %310 = vmatpush1.bf16.msra.mxu0 %v291
  %311 = vmatprep.subr.bf16.mxu0 0
  %312 = vmatpush1.bf16.msra.mxu0 %v292
  %313 = vmatprep.subr.bf16.mxu0 0
  %314 = vmatpush1.bf16.msra.mxu0 %v293
  %315 = vmatprep.subr.bf16.mxu0 0
  %316 = vmatpush1.bf16.msra.mxu0 %v294
  %317 = vmatprep.subr.bf16.mxu0 0
  %318 = vmatpush1.bf16.msra.mxu0 %v295
  %319 = vmatprep.subr.bf16.mxu0 0
  %320 = vmatpush1.bf16.msra.mxu0 0
  %321 = vmatprep.subr.bf16.mxu0 0
  %322 = vmatpush1.bf16.msra.mxu0 0
  %323 = vmatprep.subr.bf16.mxu0 0
  %324 = vmatpush1.bf16.msra.mxu0 0
  %325 = vmatprep.subr.bf16.mxu0 0
  %326 = vmatpush1.bf16.msra.mxu0 0
  %327 = vmatprep.subr.bf16.mxu0 0
  %328 = vmatpush1.bf16.msra.mxu0 0
  %329 = vmatprep.subr.bf16.mxu0 0
  %330 = vmatpush1.bf16.msra.mxu0 0
  %331 = vmatprep.subr.bf16.mxu0 0
  %332 = vmatpush1.bf16.msra.mxu0 0
  %333 = vmatprep.subr.bf16.mxu0 0
  %334 = vmatpush1.bf16.msra.mxu0 0
  %335 = vmatprep.mubr.bf16.mxu0 0
  %336 = vmatmul.mubr.bf16.gmra.mrb[0].mxu0 %v269
  %v337 = vpop.f32.mrb[0].mxu0
  %v338 = vadd.f32 %v301, %v337
  %v339 = vpop.f32.mrb[0].mxu0
  %v340 = vpop.f32.mrb[0].mxu0
  %v341 = vadd.f32 %v301, %v340
  %v342 = vpop.f32.mrb[0].mxu0
  %343 = vmatprep.mubr.bf16.mxu0 0
  %344 = vmatmul.mubr.bf16.gmra.mrb[0].mxu0 %v270
  %v345 = vpop.f32.mrb[0].mxu0
  %v346 = vadd.f32 %v301, %v345
  %v347 = vpop.f32.mrb[0].mxu0
  %v348 = vpop.f32.mrb[0].mxu0
  %v349 = vadd.f32 %v301, %v348
  %v350 = vpop.f32.mrb[0].mxu0
  %351 = vmatprep.mubr.bf16.mxu0 0
  %352 = vmatmul.mubr.bf16.gmra.mrb[0].mxu0 %v271
  %v353 = vpop.f32.mrb[0].mxu0
  %v354 = vadd.f32 %v301, %v353
  %v355 = vpop.f32.mrb[0].mxu0
  %v356 = vpop.f32.mrb[0].mxu0
  %v357 = vadd.f32 %v301, %v356
  %v358 = vpop.f32.mrb[0].mxu0
  %359 = vdwg.mxu0
  %v360 = vadd.f32 %v27, %v338
  %v361 = vadd.f32 %v28, %v341
  %v362 = vadd.f32 %v29, %v346
  %v363 = vadd.f32 %v30, %v349
  %v364 = vadd.f32 %v31, %v354
  %v365 = vadd.f32 %v32, %v357
  %366 = vst.msk [vmem:[%s7] sm:$0xff] %vm35, %v360
  %367 = vst.msk [vmem:[%s7 + $0x8] sm:$0xff] %vm35, %v361
  %368 = vst.msk [vmem:[%s7 + $0x10] sm:$0xff] %vm35, %v362
  %369 = vst.msk [vmem:[%s7 + $0x18] sm:$0xff] %vm35, %v363
  %370 = vst.msk [vmem:[%s7 + $0x20] sm:$0xff] %vm35, %v364
  %371 = vst.msk [vmem:[%s7 + $0x28] sm:$0xff] %vm35, %v365
  // Predicated region
  $region30: #{image_encoder_wrapper_forward.6} parent=0 // pred_check
    _
  $region31: #{image_encoder_wrapper_forward.6} parent=0 // pred_check_branch
    %373 = sbr.rel (0) target = $region33
  $region32: #{image_encoder_wrapper_forward.6} parent=0 // pred_region
    _
  $region33: #{image_encoder_wrapper_forward.6} parent=0 // pred_fallthru
    _
  // Predicated region
  $region34: #{image_encoder_wrapper_forward.6} parent=0 // pred_check
    _
  $region35: #{image_encoder_wrapper_forward.6} parent=0 // pred_check_branch
    %375 = sbr.rel (0) target = $region37
  $region36: #{image_encoder_wrapper_forward.6} parent=0 // pred_region
    _
  $region37: #{image_encoder_wrapper_forward.6} parent=0 // pred_fallthru
    _

// kernel: image_encoder_wrapper_forward.5
$region0: #{image_encoder_wrapper_forward.5}
  #allocation0 [shape = 'u32[]', space=smem, size = 0x4, offset = 0x4, fixed_abs, tag = 'smem constant byte address 0x4 - core index']
  #allocation1 [shape = 'u32[144,128]{1,0:T(1,128)}', space=vmem, size = 0x12000, scoped, tag = 'internal scratch']
  %s0 = inlined_call_operand.vmem [shape: f32[2,24,32], index: 0, kind: input, shape index: {}]
  %s1 = inlined_call_operand.vmem [shape: f32[1,32], index: 1, kind: input, shape index: {}]
  %s2 = inlined_call_operand.vmem [shape: f32[1,32], index: 2, kind: input, shape index: {}]
  %s3 = inlined_call_operand.vmem [shape: f32[1,32], index: 3, kind: input, shape index: {}]
  %s4 = inlined_call_operand.vmem [shape: f32[1,32], index: 4, kind: input, shape index: {}]
  %s5 = inlined_call_operand.vmem [shape: f32[2,32,16], index: 5, kind: input, shape index: {}]
  %s6 = inlined_call_operand.vmem [shape: f32[2,32,16], index: 6, kind: input, shape index: {}]
  %s7 = inlined_call_operand.vmem [shape: f32[2,32,16], index: 7, kind: input, shape index: {}]
  %s8 = inlined_call_operand.vmem [shape: f32[2,1,16], index: 8, kind: input, shape index: {}]
  %s9 = inlined_call_operand.vmem [shape: f32[2,1,16], index: 9, kind: input, shape index: {}]
  %s10 = inlined_call_operand.vmem [shape: f32[2,1,16], index: 10, kind: input, shape index: {}]
  %s11 = inlined_call_operand.vmem [shape: f32[2,16,32], index: 11, kind: input, shape index: {}]
  %s12 = inlined_call_operand.vmem [shape: f32[1,32], index: 12, kind: input, shape index: {}]
  %s13 = inlined_call_operand.vmem [shape: f32[2,24,32], index: 13, kind: output, shape index: {}]
  %s14 = sld [smem:[#allocation0]]
  $region85: #{image_encoder_wrapper_forward.5} parent=0
    _
  %s16 = ssub.s32 1, %s14
  %s17 = scalar_select 0, %s16, %s14
  loop: start=0, step=1, limit=4
  $region2: #{image_encoder_wrapper_forward.5} parent=0 // loop_pre_header
    _
  $region3: #{image_encoder_wrapper_forward.5} parent=0 // loop_header
    %s19 = sphi 0, %s23
    %p20 = scmp.ge.s32.totalorder %s19, 4
    %s29 = sphi 0, %s31
    %s32 = sphi 0, %s29
    %s33 = sphi 0, %s32
    %s49 = sphi 0, %s33
    %s53 = sphi 0, %s53
    %s55 = sphi 0, %s53
    %s56 = sphi 0, %s55
    %s70 = sphi 0, %s56
    %s74 = sphi 0, %s74
    %s76 = sphi 0, %s74
    %s77 = sphi 0, %s76
    %s91 = sphi 0, %s77
    %s95 = sphi 0, %s95
    %s97 = sphi 0, %s95
    %s98 = sphi 0, %s97
    %s112 = sphi 0, %s98
    %s116 = sphi 0, %s116
    %s118 = sphi 0, %s116
    %s119 = sphi 0, %s118
    %s133 = sphi 0, %s119
    %s137 = sphi 0, %s137
    %s139 = sphi 0, %s137
    %s140 = sphi 0, %s139
    %s154 = sphi 0, %s140
    %s158 = sphi 0, %s158
    %s160 = sphi 0, %s158
    %s161 = sphi 0, %s160
    %s175 = sphi 0, %s161
    %s179 = sphi 0, %s179
    %s181 = sphi 0, %s179
    %s182 = sphi 0, %s181
    %s196 = sphi 0, %s182
    %s200 = sphi 0, %s200
    %s202 = sphi 0, %s200
    %s203 = sphi 0, %s202
    %s217 = sphi 0, %s203
    %s221 = sphi 0, %s221
    %s223 = sphi 0, %s221
    %s224 = sphi 0, %s223
    %s238 = sphi 0, %s224
    %s242 = sphi 0, %s242
    %s244 = sphi 0, %s242
    %s245 = sphi 0, %s244
    %s259 = sphi 0, %s245
    %s263 = sphi 0, %s263
    %s265 = sphi 0, %s263
    %s266 = sphi 0, %s265
    %s280 = sphi 0, %s266
    %s284 = sphi 0, %s284
    %s286 = sphi 0, %s284
    %s287 = sphi 0, %s286
    %s301 = sphi 0, %s287
    %s307 = sphi 0, %s309
    %s310 = sphi 0, %s307
    %s311 = sphi 0, %s310
    %s327 = sphi 0, %s311
  $region4: #{image_encoder_wrapper_forward.5} parent=0 // loop_header_branch
    %22 = sbr.rel (%p20) target = $region8
  $region5: #{image_encoder_wrapper_forward.5} parent=0 // loop_body
    %s24 = ssub.s32 %s19, 1
    %s25 = ssub.s32 %s19, 2
    %s26 = sadd.s32 %s19, 1
    %s27 = ssub.s32 %s19, %s26
    %p28 = scmp.eq.s32.totalorder %s27, 0
    %s30 = sadd.s32 %s29, 1
    %s31 = scalar_select %p28, %s29, %s30
    %p34 = pneg %p28
    %p35 = scmp.eq.s32.totalorder %s19, 1
    %p36 = por %p34, %p35
    %p37 = scmp.ne.s32.totalorder %s29, %s32
    %p38 = scmp.eq.s32.totalorder %s19, 0
    %p39 = por %p37, %p38
    %p40 = scmp.ne.s32.totalorder %s29, %s32
    %p41 = scmp.eq.s32.totalorder %s24, 1
    %p42 = por %p40, %p41
    %p43 = scmp.ne.s32.totalorder %s32, %s33
    %p44 = scmp.eq.s32.totalorder %s24, 0
    %p45 = por %p43, %p44
    %p46 = scmp.ne.s32.totalorder %s32, %s33
    %p47 = scmp.eq.s32.totalorder %s25, 1
    %p48 = por %p46, %p47
    %p50 = scmp.ne.s32.totalorder %s33, %s49
    %p51 = scmp.eq.s32.totalorder %s25, 0
    %p52 = por %p50, %p51
    %s54 = sadd.s32 %s53, 1
    %p57 = scmp.eq.s32.totalorder %s19, 1
    %p58 = scmp.ne.s32.totalorder %s53, %s55
    %p59 = scmp.eq.s32.totalorder %s19, 0
    %p60 = por %p58, %p59
    %p61 = scmp.ne.s32.totalorder %s53, %s55
    %p62 = scmp.eq.s32.totalorder %s24, 1
    %p63 = por %p61, %p62
    %p64 = scmp.ne.s32.totalorder %s55, %s56
    %p65 = scmp.eq.s32.totalorder %s24, 0
    %p66 = por %p64, %p65
    %p67 = scmp.ne.s32.totalorder %s55, %s56
    %p68 = scmp.eq.s32.totalorder %s25, 1
    %p69 = por %p67, %p68
    %p71 = scmp.ne.s32.totalorder %s56, %s70
    %p72 = scmp.eq.s32.totalorder %s25, 0
    %p73 = por %p71, %p72
    %s75 = sadd.s32 %s74, 1
    %p78 = scmp.eq.s32.totalorder %s19, 1
    %p79 = scmp.ne.s32.totalorder %s74, %s76
    %p80 = scmp.eq.s32.totalorder %s19, 0
    %p81 = por %p79, %p80
    %p82 = scmp.ne.s32.totalorder %s74, %s76
    %p83 = scmp.eq.s32.totalorder %s24, 1
    %p84 = por %p82, %p83
    %p85 = scmp.ne.s32.totalorder %s76, %s77
    %p86 = scmp.eq.s32.totalorder %s24, 0
    %p87 = por %p85, %p86
    %p88 = scmp.ne.s32.totalorder %s76, %s77
    %p89 = scmp.eq.s32.totalorder %s25, 1
    %p90 = por %p88, %p89
    %p92 = scmp.ne.s32.totalorder %s77, %s91
    %p93 = scmp.eq.s32.totalorder %s25, 0
    %p94 = por %p92, %p93
    %s96 = sadd.s32 %s95, 1
    %p99 = scmp.eq.s32.totalorder %s19, 1
    %p100 = scmp.ne.s32.totalorder %s95, %s97
    %p101 = scmp.eq.s32.totalorder %s19, 0
    %p102 = por %p100, %p101
    %p103 = scmp.ne.s32.totalorder %s95, %s97
    %p104 = scmp.eq.s32.totalorder %s24, 1
    %p105 = por %p103, %p104
    %p106 = scmp.ne.s32.totalorder %s97, %s98
    %p107 = scmp.eq.s32.totalorder %s24, 0
    %p108 = por %p106, %p107
    %p109 = scmp.ne.s32.totalorder %s97, %s98
    %p110 = scmp.eq.s32.totalorder %s25, 1
    %p111 = por %p109, %p110
    %p113 = scmp.ne.s32.totalorder %s98, %s112
    %p114 = scmp.eq.s32.totalorder %s25, 0
    %p115 = por %p113, %p114
    %s117 = sadd.s32 %s116, 1
    %p120 = scmp.eq.s32.totalorder %s19, 1
    %p121 = scmp.ne.s32.totalorder %s116, %s118
    %p122 = scmp.eq.s32.totalorder %s19, 0
    %p123 = por %p121, %p122
    %p124 = scmp.ne.s32.totalorder %s116, %s118
    %p125 = scmp.eq.s32.totalorder %s24, 1
    %p126 = por %p124, %p125
    %p127 = scmp.ne.s32.totalorder %s118, %s119
    %p128 = scmp.eq.s32.totalorder %s24, 0
    %p129 = por %p127, %p128
    %p130 = scmp.ne.s32.totalorder %s118, %s119
    %p131 = scmp.eq.s32.totalorder %s25, 1
    %p132 = por %p130, %p131
    %p134 = scmp.ne.s32.totalorder %s119, %s133
    %p135 = scmp.eq.s32.totalorder %s25, 0
    %p136 = por %p134, %p135
    %s138 = sadd.s32 %s137, 1
    %p141 = scmp.eq.s32.totalorder %s19, 1
    %p142 = scmp.ne.s32.totalorder %s137, %s139
    %p143 = scmp.eq.s32.totalorder %s19, 0
    %p144 = por %p142, %p143
    %p145 = scmp.ne.s32.totalorder %s137, %s139
    %p146 = scmp.eq.s32.totalorder %s24, 1
    %p147 = por %p145, %p146
    %p148 = scmp.ne.s32.totalorder %s139, %s140
    %p149 = scmp.eq.s32.totalorder %s24, 0
    %p150 = por %p148, %p149
    %p151 = scmp.ne.s32.totalorder %s139, %s140
    %p152 = scmp.eq.s32.totalorder %s25, 1
    %p153 = por %p151, %p152
    %p155 = scmp.ne.s32.totalorder %s140, %s154
    %p156 = scmp.eq.s32.totalorder %s25, 0
    %p157 = por %p155, %p156
    %s159 = sadd.s32 %s158, 1
    %p162 = scmp.eq.s32.totalorder %s19, 1
    %p163 = scmp.ne.s32.totalorder %s158, %s160
    %p164 = scmp.eq.s32.totalorder %s19, 0
    %p165 = por %p163, %p164
    %p166 = scmp.ne.s32.totalorder %s158, %s160
    %p167 = scmp.eq.s32.totalorder %s24, 1
    %p168 = por %p166, %p167
    %p169 = scmp.ne.s32.totalorder %s160, %s161
    %p170 = scmp.eq.s32.totalorder %s24, 0
    %p171 = por %p169, %p170
    %p172 = scmp.ne.s32.totalorder %s160, %s161
    %p173 = scmp.eq.s32.totalorder %s25, 1
    %p174 = por %p172, %p173
    %p176 = scmp.ne.s32.totalorder %s161, %s175
    %p177 = scmp.eq.s32.totalorder %s25, 0
    %p178 = por %p176, %p177
    %s180 = sadd.s32 %s179, 1
    %p183 = scmp.eq.s32.totalorder %s19, 1
    %p184 = scmp.ne.s32.totalorder %s179, %s181
    %p185 = scmp.eq.s32.totalorder %s19, 0
    %p186 = por %p184, %p185
    %p187 = scmp.ne.s32.totalorder %s179, %s181
    %p188 = scmp.eq.s32.totalorder %s24, 1
    %p189 = por %p187, %p188
    %p190 = scmp.ne.s32.totalorder %s181, %s182
    %p191 = scmp.eq.s32.totalorder %s24, 0
    %p192 = por %p190, %p191
    %p193 = scmp.ne.s32.totalorder %s181, %s182
    %p194 = scmp.eq.s32.totalorder %s25, 1
    %p195 = por %p193, %p194
    %p197 = scmp.ne.s32.totalorder %s182, %s196
    %p198 = scmp.eq.s32.totalorder %s25, 0
    %p199 = por %p197, %p198
    %s201 = sadd.s32 %s200, 1
    %p204 = scmp.eq.s32.totalorder %s19, 1
    %p205 = scmp.ne.s32.totalorder %s200, %s202
    %p206 = scmp.eq.s32.totalorder %s19, 0
    %p207 = por %p205, %p206
    %p208 = scmp.ne.s32.totalorder %s200, %s202
    %p209 = scmp.eq.s32.totalorder %s24, 1
    %p210 = por %p208, %p209
    %p211 = scmp.ne.s32.totalorder %s202, %s203
    %p212 = scmp.eq.s32.totalorder %s24, 0
    %p213 = por %p211, %p212
    %p214 = scmp.ne.s32.totalorder %s202, %s203
    %p215 = scmp.eq.s32.totalorder %s25, 1
    %p216 = por %p214, %p215
    %p218 = scmp.ne.s32.totalorder %s203, %s217
    %p219 = scmp.eq.s32.totalorder %s25, 0
    %p220 = por %p218, %p219
    %s222 = sadd.s32 %s221, 1
    %p225 = scmp.eq.s32.totalorder %s19, 1
    %p226 = scmp.ne.s32.totalorder %s221, %s223
    %p227 = scmp.eq.s32.totalorder %s19, 0
    %p228 = por %p226, %p227
    %p229 = scmp.ne.s32.totalorder %s221, %s223
    %p230 = scmp.eq.s32.totalorder %s24, 1
    %p231 = por %p229, %p230
    %p232 = scmp.ne.s32.totalorder %s223, %s224
    %p233 = scmp.eq.s32.totalorder %s24, 0
    %p234 = por %p232, %p233
    %p235 = scmp.ne.s32.totalorder %s223, %s224
    %p236 = scmp.eq.s32.totalorder %s25, 1
    %p237 = por %p235, %p236
    %p239 = scmp.ne.s32.totalorder %s224, %s238
    %p240 = scmp.eq.s32.totalorder %s25, 0
    %p241 = por %p239, %p240
    %s243 = sadd.s32 %s242, 1
    %p246 = scmp.eq.s32.totalorder %s19, 1
    %p247 = scmp.ne.s32.totalorder %s242, %s244
    %p248 = scmp.eq.s32.totalorder %s19, 0
    %p249 = por %p247, %p248
    %p250 = scmp.ne.s32.totalorder %s242, %s244
    %p251 = scmp.eq.s32.totalorder %s24, 1
    %p252 = por %p250, %p251
    %p253 = scmp.ne.s32.totalorder %s244, %s245
    %p254 = scmp.eq.s32.totalorder %s24, 0
    %p255 = por %p253, %p254
    %p256 = scmp.ne.s32.totalorder %s244, %s245
    %p257 = scmp.eq.s32.totalorder %s25, 1
    %p258 = por %p256, %p257
    %p260 = scmp.ne.s32.totalorder %s245, %s259
    %p261 = scmp.eq.s32.totalorder %s25, 0
    %p262 = por %p260, %p261
    %s264 = sadd.s32 %s263, 1
    %p267 = scmp.eq.s32.totalorder %s19, 1
    %p268 = scmp.ne.s32.totalorder %s263, %s265
    %p269 = scmp.eq.s32.totalorder %s19, 0
    %p270 = por %p268, %p269
    %p271 = scmp.ne.s32.totalorder %s263, %s265
    %p272 = scmp.eq.s32.totalorder %s24, 1
    %p273 = por %p271, %p272
    %p274 = scmp.ne.s32.totalorder %s265, %s266
    %p275 = scmp.eq.s32.totalorder %s24, 0
    %p276 = por %p274, %p275
    %p277 = scmp.ne.s32.totalorder %s265, %s266
    %p278 = scmp.eq.s32.totalorder %s25, 1
    %p279 = por %p277, %p278
    %p281 = scmp.ne.s32.totalorder %s266, %s280
    %p282 = scmp.eq.s32.totalorder %s25, 0
    %p283 = por %p281, %p282
    %s285 = sadd.s32 %s284, 1
    %p288 = scmp.eq.s32.totalorder %s19, 1
    %p289 = scmp.ne.s32.totalorder %s284, %s286
    %p290 = scmp.eq.s32.totalorder %s19, 0
    %p291 = por %p289, %p290
    %p292 = scmp.ne.s32.totalorder %s284, %s286
    %p293 = scmp.eq.s32.totalorder %s24, 1
    %p294 = por %p292, %p293
    %p295 = scmp.ne.s32.totalorder %s286, %s287
    %p296 = scmp.eq.s32.totalorder %s24, 0
    %p297 = por %p295, %p296
    %p298 = scmp.ne.s32.totalorder %s286, %s287
    %p299 = scmp.eq.s32.totalorder %s25, 1
    %p300 = por %p298, %p299
    %p302 = scmp.ne.s32.totalorder %s287, %s301
    %p303 = scmp.eq.s32.totalorder %s25, 0
    %p304 = por %p302, %p303
    %s305 = ssub.s32 %s19, %s26
    %p306 = scmp.eq.s32.totalorder %s305, 0
    %s308 = sadd.s32 %s307, 1
    %s309 = scalar_select %p306, %s307, %s308
    %p312 = pneg %p306
    %p313 = scmp.eq.s32.totalorder %s19, 1
    %p314 = por %p312, %p313
    %p315 = scmp.ne.s32.totalorder %s307, %s310
    %p316 = scmp.eq.s32.totalorder %s19, 0
    %p317 = por %p315, %p316
    %p318 = scmp.ne.s32.totalorder %s307, %s310
    %p319 = scmp.eq.s32.totalorder %s24, 1
    %p320 = por %p318, %p319
    %p321 = scmp.ne.s32.totalorder %s310, %s311
    %p322 = scmp.eq.s32.totalorder %s24, 0
    %p323 = por %p321, %p322
    %p324 = scmp.ne.s32.totalorder %s310, %s311
    %p325 = scmp.eq.s32.totalorder %s25, 1
    %p326 = por %p324, %p325
    %p328 = scmp.ne.s32.totalorder %s311, %s327
    %p329 = scmp.eq.s32.totalorder %s25, 0
    %p330 = por %p328, %p329
    %p331 = scmp.le.s32.totalorder 1, %s19
    %p332 = scmp.lt.s32.totalorder %s19, 3
    %p333 = pnand %p331, %p332
    %p334 = pneg %p333
    // Predicated region
    $region9: #{image_encoder_wrapper_forward.5} parent=5 // pred_check
      _
    $region10: #{image_encoder_wrapper_forward.5} parent=5 // pred_check_branch
      %336 = sbr.rel (%p333) target = $region12
    $region11: #{image_encoder_wrapper_forward.5} parent=5 // pred_region
      %s337 = ssub.s32 %s19, 1
      // Predicated region
      $region13: #{image_encoder_wrapper_forward.5} parent=11 // pred_check
        %p338 = pneg %p66
      $region14: #{image_encoder_wrapper_forward.5} parent=11 // pred_check_branch
        %340 = sbr.rel (%p338) target = $region16
      $region15: #{image_encoder_wrapper_forward.5} parent=11 // pred_region
        _
      $region16: #{image_encoder_wrapper_forward.5} parent=11 // pred_fallthru
        _
      // Predicated region
      $region17: #{image_encoder_wrapper_forward.5} parent=11 // pred_check
        %p341 = pneg %p87
      $region18: #{image_encoder_wrapper_forward.5} parent=11 // pred_check_branch
        %343 = sbr.rel (%p341) target = $region20
      $region19: #{image_encoder_wrapper_forward.5} parent=11 // pred_region
        _
      $region20: #{image_encoder_wrapper_forward.5} parent=11 // pred_fallthru
        _
      // Predicated region
      $region21: #{image_encoder_wrapper_forward.5} parent=11 // pred_check
        %p344 = pneg %p108
      $region22: #{image_encoder_wrapper_forward.5} parent=11 // pred_check_branch
        %346 = sbr.rel (%p344) target = $region24
      $region23: #{image_encoder_wrapper_forward.5} parent=11 // pred_region
        _
      $region24: #{image_encoder_wrapper_forward.5} parent=11 // pred_fallthru
        _
      // Predicated region
      $region25: #{image_encoder_wrapper_forward.5} parent=11 // pred_check
        %p347 = pneg %p129
      $region26: #{image_encoder_wrapper_forward.5} parent=11 // pred_check_branch
        %349 = sbr.rel (%p347) target = $region28
      $region27: #{image_encoder_wrapper_forward.5} parent=11 // pred_region
        _
      $region28: #{image_encoder_wrapper_forward.5} parent=11 // pred_fallthru
        _
      // Predicated region
      $region29: #{image_encoder_wrapper_forward.5} parent=11 // pred_check
        %p350 = pneg %p150
      $region30: #{image_encoder_wrapper_forward.5} parent=11 // pred_check_branch
        %352 = sbr.rel (%p350) target = $region32
      $region31: #{image_encoder_wrapper_forward.5} parent=11 // pred_region
        _
      $region32: #{image_encoder_wrapper_forward.5} parent=11 // pred_fallthru
        _
      // Predicated region
      $region33: #{image_encoder_wrapper_forward.5} parent=11 // pred_check
        %p353 = pneg %p171
      $region34: #{image_encoder_wrapper_forward.5} parent=11 // pred_check_branch
        %355 = sbr.rel (%p353) target = $region36
      $region35: #{image_encoder_wrapper_forward.5} parent=11 // pred_region
        _
      $region36: #{image_encoder_wrapper_forward.5} parent=11 // pred_fallthru
        _
      // Predicated region
      $region37: #{image_encoder_wrapper_forward.5} parent=11 // pred_check
        %p356 = pneg %p192
      $region38: #{image_encoder_wrapper_forward.5} parent=11 // pred_check_branch
        %358 = sbr.rel (%p356) target = $region40
      $region39: #{image_encoder_wrapper_forward.5} parent=11 // pred_region
        _
      $region40: #{image_encoder_wrapper_forward.5} parent=11 // pred_fallthru
        _
      // Predicated region
      $region41: #{image_encoder_wrapper_forward.5} parent=11 // pred_check
        %p359 = pneg %p213
      $region42: #{image_encoder_wrapper_forward.5} parent=11 // pred_check_branch
        %361 = sbr.rel (%p359) target = $region44
      $region43: #{image_encoder_wrapper_forward.5} parent=11 // pred_region
        _
      $region44: #{image_encoder_wrapper_forward.5} parent=11 // pred_fallthru
        _
      // Predicated region
      $region45: #{image_encoder_wrapper_forward.5} parent=11 // pred_check
        %p362 = pneg %p234
      $region46: #{image_encoder_wrapper_forward.5} parent=11 // pred_check_branch
        %364 = sbr.rel (%p362) target = $region48
      $region47: #{image_encoder_wrapper_forward.5} parent=11 // pred_region
        _
      $region48: #{image_encoder_wrapper_forward.5} parent=11 // pred_fallthru
        _
      // Predicated region
      $region49: #{image_encoder_wrapper_forward.5} parent=11 // pred_check
        %p365 = pneg %p255
      $region50: #{image_encoder_wrapper_forward.5} parent=11 // pred_check_branch
        %367 = sbr.rel (%p365) target = $region52
      $region51: #{image_encoder_wrapper_forward.5} parent=11 // pred_region
        _
      $region52: #{image_encoder_wrapper_forward.5} parent=11 // pred_fallthru
        _
      // Predicated region
      $region53: #{image_encoder_wrapper_forward.5} parent=11 // pred_check
        %p368 = pneg %p276
      $region54: #{image_encoder_wrapper_forward.5} parent=11 // pred_check_branch
        %370 = sbr.rel (%p368) target = $region56
      $region55: #{image_encoder_wrapper_forward.5} parent=11 // pred_region
        _
      $region56: #{image_encoder_wrapper_forward.5} parent=11 // pred_fallthru
        _
      // Predicated region
      $region57: #{image_encoder_wrapper_forward.5} parent=11 // pred_check
        %p371 = pneg %p297
      $region58: #{image_encoder_wrapper_forward.5} parent=11 // pred_check_branch
        %373 = sbr.rel (%p371) target = $region60
      $region59: #{image_encoder_wrapper_forward.5} parent=11 // pred_region
        _
      $region60: #{image_encoder_wrapper_forward.5} parent=11 // pred_fallthru
        _
    $region12: #{image_encoder_wrapper_forward.5} parent=5 // pred_fallthru
      _
    %p374 = scmp.lt.s32.totalorder %s19, 2
    // Predicated region
    $region61: #{image_encoder_wrapper_forward.5} parent=5 // pred_check
      %p375 = pneg %p374
    $region62: #{image_encoder_wrapper_forward.5} parent=5 // pred_check_branch
      %377 = sbr.rel (%p375) target = $region64
    $region63: #{image_encoder_wrapper_forward.5} parent=5 // pred_region
      // Predicated region
      $region65: #{image_encoder_wrapper_forward.5} parent=63 // pred_check
        %p378 = pneg %p39
      $region66: #{image_encoder_wrapper_forward.5} parent=63 // pred_check_branch
        %380 = sbr.rel (%p378) target = $region68
      $region67: #{image_encoder_wrapper_forward.5} parent=63 // pred_region
        %p381 = scmp.lt.s32.totalorder %s19, 1
        %s382 = scalar_select %p381, %s19, 1
        %s383 = smul.addr %s382, 3
        %s384 = smul.addr %s383, 8
        %s385 = scalar_lea.vmem %s0, %s384
      $region68: #{image_encoder_wrapper_forward.5} parent=63 // pred_fallthru
        _
    $region64: #{image_encoder_wrapper_forward.5} parent=5 // pred_fallthru
      _
    %p386 = scmp.le.s32.totalorder 1, %s19
    %p387 = scmp.lt.s32.totalorder %s19, 3
    %p388 = pnand %p386, %p387
    %p389 = pneg %p388
    // Predicated region
    $region69: #{image_encoder_wrapper_forward.5} parent=5 // pred_check
      _
    $region70: #{image_encoder_wrapper_forward.5} parent=5 // pred_check_branch
      %391 = sbr.rel (%p388) target = $region72
    $region71: #{image_encoder_wrapper_forward.5} parent=5 // pred_region
      %s392 = ssub.s32 %s19, 1
      %p393 = scmp.lt.s32.totalorder %s24, 1
      %s394 = scalar_select %p393, %s24, 1
      %s395 = smul.addr %s394, 3
      %s396 = smul.addr %s395, 8
      %s397 = scalar_lea.vmem %s0, %s396
      %p398 = pneg %p45
      %p399 = pneg %p42
      %p400 = pneg %p66
      %p401 = pneg %p63
      %p402 = pneg %p87
      %p403 = pneg %p84
      %p404 = pneg %p108
      %p405 = pneg %p105
      %p406 = pneg %p129
      %p407 = pneg %p126
      %p408 = pneg %p150
      %p409 = pneg %p147
      %p410 = pneg %p171
      %p411 = pneg %p168
      %p412 = pneg %p192
      %p413 = pneg %p189
      %p414 = pneg %p213
      %p415 = pneg %p210
      %p416 = pneg %p234
      %p417 = pneg %p231
      %p418 = pneg %p255
      %p419 = pneg %p252
      %p420 = pneg %p276
      %p421 = pneg %p273
      %p422 = pneg %p297
      %p423 = pneg %p294
      %p424 = pneg %p323
      %p425 = pneg %p320
      %p426 = scmp.lt.s32.totalorder %s24, 1
      %s427 = scalar_select %p426, %s24, 1
      %s428 = smul.addr %s427, 3
      %s429 = smul.addr %s428, 8
      %s430 = scalar_lea.vmem %s13, %s429
      %p431 = scmp.lt.s32.totalorder %s24, 1
      %s432 = scalar_select %p431, %s24, 1
      %s433 = smul.addr %s432, 3
      %s434 = smul.addr %s433, 8
      %s435 = scalar_lea.vmem %s0, %s434
      %p436 = scmp.lt.s32.totalorder %s24, 1
      %s437 = scalar_select %p436, %s24, 1
      %s438 = smul.addr %s437, 3
      %s439 = smul.addr %s438, 8
      %s440 = scalar_lea.vmem %s13, %s439
      %v442 = vld [vmem:[%s435] sm:$0xff]
      %v443 = vld [vmem:[%s435 + $0x8] sm:$0xff]
      %v444 = vld [vmem:[%s435 + $0x10] sm:$0xff]
      %v445 = vld [vmem:[%s1] sm:$0x1]
      %v446 = vld [vmem:[%s2] sm:$0x1]
      %vm447 = vcmask 261120
      %v448 = vsel %vm447, %v442, 0.0
      %449 = vadd.xlane.f32.xlu0 %v448
      %v450 = vpop.xlane.xlu0 %449
      %v451 = vsel %vm447, %v443, 0.0
      %452 = vadd.xlane.f32.xlu0 %v451
      %v453 = vpop.xlane.xlu0 %452
      %v454 = vsel %vm447, %v444, 0.0
      %455 = vadd.xlane.f32.xlu0 %v454
      %v456 = vpop.xlane.xlu0 %455
      %v457 = vrcp.pop 32.0
      %v458 = vmul.f32 %v450, %v457
      %v459 = vmul.f32 %v453, %v457
      %v460 = vmul.f32 %v456, %v457
      %v461 = vsub.f32 %v442, %v458
      %v462 = vsub.f32 %v443, %v459
      %v463 = vsub.f32 %v444, %v460
      %v464 = vmul.f32 %v461, %v461
      %v465 = vmul.f32 %v462, %v462
      %v466 = vmul.f32 %v463, %v463
      %v467 = vsel %vm447, %v464, 0.0
      %468 = vadd.xlane.f32.xlu0 %v467
      %v469 = vpop.xlane.xlu0 %468
      %v470 = vsel %vm447, %v465, 0.0
      %471 = vadd.xlane.f32.xlu0 %v470
      %v472 = vpop.xlane.xlu0 %471
      %v473 = vsel %vm447, %v466, 0.0
      %474 = vadd.xlane.f32.xlu0 %v473
      %v475 = vpop.xlane.xlu0 %474
      %v476 = vmul.f32 %v469, %v457
      %v477 = vmul.f32 %v472, %v457
      %v478 = vmul.f32 %v475, %v457
      %v479 = vadd.f32 %v476, 1e-05
      %v480 = vadd.f32 %v477, 1e-05
      %v481 = vadd.f32 %v478, 1e-05
      %v482 = vrsqrt.pop %v479
      %v483 = vrsqrt.pop %v480
      %v484 = vrsqrt.pop %v481
      %v485 = vmul.f32 %v461, %v482
      %v486 = vmul.f32 %v462, %v483
      %v487 = vmul.f32 %v463, %v484
      %v489 = vlaneseq
      %v490 = vshrl.u32 %v489, 7
      %v491 = vsub.s32 0, %v490
      %v492 = vrot.slane %v445, %v491
      %v494 = vmul.f32 %v485, %v492
      %v495 = vmul.f32 %v486, %v492
      %v496 = vmul.f32 %v487, %v492
      %v498 = vlaneseq
      %v499 = vshrl.u32 %v498, 7
      %v500 = vsub.s32 0, %v499
      %v501 = vrot.slane %v446, %v500
      %v503 = vadd.f32 %v494, %v501
      %v504 = vadd.f32 %v495, %v501
      %v505 = vadd.f32 %v496, %v501
      %v506 = vld [vmem:[%s3] sm:$0x1]
      %v507 = vld [vmem:[%s4] sm:$0x1]
      %v508 = vsel %vm447, %v503, 0.0
      %509 = vadd.xlane.f32.xlu0 %v508
      %v510 = vpop.xlane.xlu0 %509
      %v511 = vsel %vm447, %v504, 0.0
      %512 = vadd.xlane.f32.xlu0 %v511
      %v513 = vpop.xlane.xlu0 %512
      %v514 = vsel %vm447, %v505, 0.0
      %515 = vadd.xlane.f32.xlu0 %v514
      %v516 = vpop.xlane.xlu0 %515
      %v517 = vmul.f32 %v510, %v457
      %v518 = vmul.f32 %v513, %v457
      %v519 = vmul.f32 %v516, %v457
      %v520 = vsub.f32 %v503, %v517
      %v521 = vsub.f32 %v504, %v518
      %v522 = vsub.f32 %v505, %v519
      %v523 = vmul.f32 %v520, %v520
      %v524 = vmul.f32 %v521, %v521
      %v525 = vmul.f32 %v522, %v522
      %v526 = vsel %vm447, %v523, 0.0
      %527 = vadd.xlane.f32.xlu0 %v526
      %v528 = vpop.xlane.xlu0 %527
      %v529 = vsel %vm447, %v524, 0.0
      %530 = vadd.xlane.f32.xlu0 %v529
      %v531 = vpop.xlane.xlu0 %530
      %v532 = vsel %vm447, %v525, 0.0
      %533 = vadd.xlane.f32.xlu0 %v532
      %v534 = vpop.xlane.xlu0 %533
      %v535 = vmul.f32 %v528, %v457
      %v536 = vmul.f32 %v531, %v457
      %v537 = vmul.f32 %v534, %v457
      %v538 = vadd.f32 %v535, 1e-05
      %v539 = vadd.f32 %v536, 1e-05
      %v540 = vadd.f32 %v537, 1e-05
      %v541 = vrsqrt.pop %v538
      %v542 = vrsqrt.pop %v539
      %v543 = vrsqrt.pop %v540
      %v544 = vmul.f32 %v520, %v541
      %v545 = vmul.f32 %v521, %v542
      %v546 = vmul.f32 %v522, %v543
      %v548 = vlaneseq
      %v549 = vshrl.u32 %v548, 7
      %v550 = vsub.s32 0, %v549
      %v551 = vrot.slane %v506, %v550
      %v553 = vmul.f32 %v544, %v551
      %v554 = vmul.f32 %v545, %v551
      %v555 = vmul.f32 %v546, %v551
      %v557 = vlaneseq
      %v558 = vshrl.u32 %v557, 7
      %v559 = vsub.s32 0, %v558
      %v560 = vrot.slane %v507, %v559
      %v562 = vadd.f32 %v553, %v560
      %v563 = vadd.f32 %v554, %v560
      %v564 = vadd.f32 %v555, %v560
      %v565 = vpack.c.bf16 %v563, %v562
      %v566 = vpack.c.bf16 %v564, %v564
      %v567 = vlaneseq
      %v568 = vand.u32 %v567, 127
      %vm569 = vcmp.lt.s32.totalorder %v568, 17
      %v570 = vsel %vm569, 0.0, -1e+30
      %v571 = vld [vmem:[%s5] sm:$0xff]
      %v572 = vld [vmem:[%s5 + $0x8] sm:$0xff]
      %v573 = vld [vmem:[%s5 + $0x10] sm:$0xff]
      %v574 = vld [vmem:[%s5 + $0x18] sm:$0xff]
      %v575 = vpack.c.bf16 %v572, %v571
      %v576 = vpack.c.bf16 %v574, %v573
      %v577 = vld [vmem:[%s8] sm:$0x1]
      %v579 = vlaneseq
      %v580 = vshrl.u32 %v579, 7
      %v581 = vsub.s32 0, %v580
      %v582 = vrot.slane %v577, %v581
      %v585 = vsel %vm447, %v565, 0
      %v588 = vsel %vm447, %v566, 0
      %590 = vmatprep.subr.bf16.mxu0 0
      %591 = vmatpush1.bf16.msra.mxu0 %v575
      %592 = vmatprep.subr.bf16.mxu0 0
      %593 = vmatpush1.bf16.msra.mxu0 %v576
      %594 = vmatprep.subr.bf16.mxu0 0
      %595 = vmatpush1.bf16.msra.mxu0 0
      %596 = vmatprep.subr.bf16.mxu0 0
      %597 = vmatpush1.bf16.msra.mxu0 0
      %598 = vmatprep.subr.bf16.mxu0 0
      %599 = vmatpush1.bf16.msra.mxu0 0
      %600 = vmatprep.subr.bf16.mxu0 0
      %601 = vmatpush1.bf16.msra.mxu0 0
      %602 = vmatprep.subr.bf16.mxu0 0
      %603 = vmatpush1.bf16.msra.mxu0 0
      %604 = vmatprep.subr.bf16.mxu0 0
      %605 = vmatpush1.bf16.msra.mxu0 0
      %606 = vmatprep.subr.bf16.mxu0 0
      %607 = vmatpush1.bf16.msra.mxu0 0
      %608 = vmatprep.subr.bf16.mxu0 0
      %609 = vmatpush1.bf16.msra.mxu0 0
      %610 = vmatprep.subr.bf16.mxu0 0
      %611 = vmatpush1.bf16.msra.mxu0 0
      %612 = vmatprep.subr.bf16.mxu0 0
      %613 = vmatpush1.bf16.msra.mxu0 0
      %614 = vmatprep.subr.bf16.mxu0 0
      %615 = vmatpush1.bf16.msra.mxu0 0
      %616 = vmatprep.subr.bf16.mxu0 0
      %617 = vmatpush1.bf16.msra.mxu0 0
      %618 = vmatprep.subr.bf16.mxu0 0
      %619 = vmatpush1.bf16.msra.mxu0 0
      %620 = vmatprep.subr.bf16.mxu0 0
      %621 = vmatpush1.bf16.msra.mxu0 0
      %622 = vmatprep.mubr.bf16.mxu0 0
      %623 = vmatmul.mubr.bf16.gmra.mrb[0].mxu0 %v585
      %v624 = vpop.f32.mrb[0].mxu0
      %v625 = vadd.f32 %v582, %v624
      %v626 = vpop.f32.mrb[0].mxu0
      %v627 = vpop.f32.mrb[0].mxu0
      %v628 = vadd.f32 %v582, %v627
      %v629 = vpop.f32.mrb[0].mxu0
      %630 = vmatprep.mubr.bf16.mxu0 0
      %631 = vmatmul.mubr.bf16.gmra.mrb[0].mxu0 %v588
      %v632 = vpop.f32.mrb[0].mxu0
      %v633 = vadd.f32 %v582, %v632
      %v634 = vpop.f32.mrb[0].mxu0
      %v635 = vpop.f32.mrb[0].mxu0
      %v636 = vpop.f32.mrb[0].mxu0
      %637 = vdwg.mxu0
      %v638 = vld [vmem:[%s6] sm:$0xff]
      %v639 = vld [vmem:[%s6 + $0x8] sm:$0xff]
      %v640 = vld [vmem:[%s6 + $0x10] sm:$0xff]
      %v641 = vld [vmem:[%s6 + $0x18] sm:$0xff]
      %v642 = vpack.c.bf16 %v639, %v638
      %v643 = vpack.c.bf16 %v641, %v640
      %v644 = vld [vmem:[%s9] sm:$0x1]
      %v646 = vlaneseq
      %v647 = vshrl.u32 %v646, 7
      %v648 = vsub.s32 0, %v647
      %v649 = vrot.slane %v644, %v648
      %651 = vmatprep.subr.bf16.mxu0 0
      %652 = vmatpush1.bf16.msra.mxu0 %v642
      %653 = vmatprep.subr.bf16.mxu0 0
      %654 = vmatpush1.bf16.msra.mxu0 %v643
      %655 = vmatprep.subr.bf16.mxu0 0
      %656 = vmatpush1.bf16.msra.mxu0 0
      %657 = vmatprep.subr.bf16.mxu0 0
      %658 = vmatpush1.bf16.msra.mxu0 0
      %659 = vmatprep.subr.bf16.mxu0 0
      %660 = vmatpush1.bf16.msra.mxu0 0
      %661 = vmatprep.subr.bf16.mxu0 0
      %662 = vmatpush1.bf16.msra.mxu0 0
      %663 = vmatprep.subr.bf16.mxu0 0
      %664 = vmatpush1.bf16.msra.mxu0 0
      %665 = vmatprep.subr.bf16.mxu0 0
      %666 = vmatpush1.bf16.msra.mxu0 0
      %667 = vmatprep.subr.bf16.mxu0 0
      %668 = vmatpush1.bf16.msra.mxu0 0
      %669 = vmatprep.subr.bf16.mxu0 0
      %670 = vmatpush1.bf16.msra.mxu0 0
      %671 = vmatprep.subr.bf16.mxu0 0
      %672 = vmatpush1.bf16.msra.mxu0 0
      %673 = vmatprep.subr.bf16.mxu0 0
      %674 = vmatpush1.bf16.msra.mxu0 0
      %675 = vmatprep.subr.bf16.mxu0 0
      %676 = vmatpush1.bf16.msra.mxu0 0
      %677 = vmatprep.subr.bf16.mxu0 0
      %678 = vmatpush1.bf16.msra.mxu0 0
      %679 = vmatprep.subr.bf16.mxu0 0
      %680 = vmatpush1.bf16.msra.mxu0 0
      %681 = vmatprep.subr.bf16.mxu0 0
      %682 = vmatpush1.bf16.msra.mxu0 0
      %683 = vmatprep.mubr.bf16.mxu0 0
      %684 = vmatmul.mubr.bf16.gmra.mrb[0].mxu0 %v585
      %v685 = vpop.f32.mrb[0].mxu0
      %v686 = vadd.f32 %v649, %v685
      %v687 = vpop.f32.mrb[0].mxu0
      %v688 = vpop.f32.mrb[0].mxu0
      %v689 = vadd.f32 %v649, %v688
      %v690 = vpop.f32.mrb[0].mxu0
      %691 = vmatprep.mubr.bf16.mxu0 0
      %692 = vmatmul.mubr.bf16.gmra.mrb[0].mxu0 %v588
      %v693 = vpop.f32.mrb[0].mxu0
      %v694 = vadd.f32 %v649, %v693
      %v695 = vpop.f32.mrb[0].mxu0
      %v696 = vpop.f32.mrb[0].mxu0
      %v697 = vpop.f32.mrb[0].mxu0
      %698 = vdwg.mxu0
      %v699 = vld [vmem:[%s7] sm:$0xff]
      %v700 = vld [vmem:[%s7 + $0x8] sm:$0xff]
      %v701 = vld [vmem:[%s7 + $0x10] sm:$0xff]
      %v702 = vld [vmem:[%s7 + $0x18] sm:$0xff]
      %v703 = vpack.c.bf16 %v700, %v699
      %v704 = vpack.c.bf16 %v702, %v701
      %v705 = vld [vmem:[%s10] sm:$0x1]
      %v707 = vlaneseq
      %v708 = vshrl.u32 %v707, 7
      %v709 = vsub.s32 0, %v708
      %v710 = vrot.slane %v705, %v709
      %712 = vmatprep.subr.bf16.mxu0 0
      %713 = vmatpush1.bf16.msra.mxu0 %v703
      %714 = vmatprep.subr.bf16.mxu0 0
      %715 = vmatpush1.bf16.msra.mxu0 %v704
      %716 = vmatprep.subr.bf16.mxu0 0
      %717 = vmatpush1.bf16.msra.mxu0 0
      %718 = vmatprep.subr.bf16.mxu0 0
      %719 = vmatpush1.bf16.msra.mxu0 0
      %720 = vmatprep.subr.bf16.mxu0 0
      %721 = vmatpush1.bf16.msra.mxu0 0
      %722 = vmatprep.subr.bf16.mxu0 0
      %723 = vmatpush1.bf16.msra.mxu0 0
      %724 = vmatprep.subr.bf16.mxu0 0
      %725 = vmatpush1.bf16.msra.mxu0 0
      %726 = vmatprep.subr.bf16.mxu0 0
      %727 = vmatpush1.bf16.msra.mxu0 0
      %728 = vmatprep.subr.bf16.mxu0 0
      %729 = vmatpush1.bf16.msra.mxu0 0
      %730 = vmatprep.subr.bf16.mxu0 0
      %731 = vmatpush1.bf16.msra.mxu0 0
      %732 = vmatprep.subr.bf16.mxu0 0
      %733 = vmatpush1.bf16.msra.mxu0 0
      %734 = vmatprep.subr.bf16.mxu0 0
      %735 = vmatpush1.bf16.msra.mxu0 0
      %736 = vmatprep.subr.bf16.mxu0 0
      %737 = vmatpush1.bf16.msra.mxu0 0
      %738 = vmatprep.subr.bf16.mxu0 0
      %739 = vmatpush1.bf16.msra.mxu0 0
      %740 = vmatprep.subr.bf16.mxu0 0
      %741 = vmatpush1.bf16.msra.mxu0 0
      %742 = vmatprep.subr.bf16.mxu0 0
      %743 = vmatpush1.bf16.msra.mxu0 0
      %744 = vmatprep.mubr.bf16.mxu0 0
      %745 = vmatmul.mubr.bf16.gmra.mrb[0].mxu0 %v585
      %v746 = vpop.f32.mrb[0].mxu0
      %v747 = vadd.f32 %v710, %v746
      %v748 = vpop.f32.mrb[0].mxu0
      %v749 = vpop.f32.mrb[0].mxu0
      %v750 = vadd.f32 %v710, %v749
      %v751 = vpop.f32.mrb[0].mxu0
      %752 = vmatprep.mubr.bf16.mxu0 0
      %753 = vmatmul.mubr.bf16.gmra.mrb[0].mxu0 %v588
      %v754 = vpop.f32.mrb[0].mxu0
      %v755 = vadd.f32 %v710, %v754
      %v756 = vpop.f32.mrb[0].mxu0
      %v757 = vpop.f32.mrb[0].mxu0
      %v758 = vpop.f32.mrb[0].mxu0
      %759 = vdwg.mxu0
      %v760 = vpack.c.bf16 %v628, %v625
      %v761 = vpack.c.bf16 %v633, %v633
      %v762 = vpack.c.bf16 %v689, %v686
      %v763 = vpack.c.bf16 %v694, %v694
      %vm764 = vcmask 130048
      %v766 = vsel %vm764, %v760, 0
      %v769 = vsel %vm764, %v761, 0
      %v772 = vsel %vm764, %v762, 0
      %v775 = vsel %vm764, %v763, 0
      %777 = vmatprep.subr.bf16.mxu0 0
      %778 = vmatpush1.bf16.xpose.msra.mxu0 %v772
      %779 = vmatprep.subr.bf16.mxu0 0
      %780 = vmatpush1.bf16.xpose.msra.mxu0 %v775
      %781 = vmatprep.subr.bf16.mxu0 0
      %782 = vmatpush1.bf16.xpose.msra.mxu0 0
      %783 = vmatprep.subr.bf16.mxu0 0
      %784 = vmatpush1.bf16.xpose.msra.mxu0 0
      %785 = vmatprep.subr.bf16.mxu0 0
      %786 = vmatpush1.bf16.xpose.msra.mxu0 0
      %787 = vmatprep.subr.bf16.mxu0 0
      %788 = vmatpush1.bf16.xpose.msra.mxu0 0
      %789 = vmatprep.subr.bf16.mxu0 0
      %790 = vmatpush1.bf16.xpose.msra.mxu0 0
      %791 = vmatprep.subr.bf16.mxu0 0
      %792 = vmatpush1.bf16.xpose.msra.mxu0 0
      %793 = vmatprep.subr.bf16.mxu0 0
      %794 = vmatpush1.bf16.xpose.msra.mxu0 0
      %795 = vmatprep.subr.bf16.mxu0 0
      %796 = vmatpush1.bf16.xpose.msra.mxu0 0
      %797 = vmatprep.subr.bf16.mxu0 0
      %798 = vmatpush1.bf16.xpose.msra.mxu0 0
      %799 = vmatprep.subr.bf16.mxu0 0
      %800 = vmatpush1.bf16.xpose.msra.mxu0 0
      %801 = vmatprep.subr.bf16.mxu0 0
      %802 = vmatpush1.bf16.xpose.msra.mxu0 0
      %803 = vmatprep.subr.bf16.mxu0 0
      %804 = vmatpush1.bf16.xpose.msra.mxu0 0
      %805 = vmatprep.subr.bf16.mxu0 0
      %806 = vmatpush1.bf16.xpose.msra.mxu0 0
      %807 = vmatprep.subr.bf16.mxu0 0
      %808 = vmatpush1.bf16.xpose.msra.mxu0 0
      %809 = vmatprep.mubr.bf16.mxu0 0
      %810 = vmatmul.mubr.bf16.gmra.mrb[0].mxu0 %v766
      %v811 = vpop.f32.mrb[0].mxu0
      %v812 = vadd.f32 %v570, %v811
      %v813 = vpop.f32.mrb[0].mxu0
      %v814 = vpop.f32.mrb[0].mxu0
      %v815 = vadd.f32 %v570, %v814
      %v816 = vpop.f32.mrb[0].mxu0
      %817 = vmatprep.mubr.bf16.mxu0 0
      %818 = vmatmul.mubr.bf16.gmra.mrb[0].mxu0 %v769
      %v819 = vpop.f32.mrb[0].mxu0
      %v820 = vadd.f32 %v570, %v819
      %v821 = vpop.f32.mrb[0].mxu0
      %v822 = vpop.f32.mrb[0].mxu0
      %v823 = vpop.f32.mrb[0].mxu0
      %824 = vdwg.mxu0
      %vm825 = vcmask 195584
      %v826 = vsel %vm825, %v812, -inf
      %827 = vmax.xlane.f32.xlu0 %v826
      %v828 = vpop.xlane.xlu0 %827
      %v829 = vsel %vm825, %v815, -inf
      %830 = vmax.xlane.f32.xlu0 %v829
      %v831 = vpop.xlane.xlu0 %830
      %v832 = vsel %vm825, %v820, -inf
      %833 = vmax.xlane.f32.xlu0 %v832
      %v834 = vpop.xlane.xlu0 %833
      %v835 = vsub.f32 %v812, %v828
      %v836 = vsub.f32 %v815, %v831
      %v837 = vsub.f32 %v820, %v834
      %v838 = vmul.f32 %v835, 1.442695
      %v839 = vpow.pop %v838
      %v840 = vmul.f32 %v836, 1.442695
      %v841 = vpow.pop %v840
      %v842 = vmul.f32 %v837, 1.442695
      %v843 = vpow.pop %v842
      %v844 = vsel %vm825, %v839, 0.0
      %845 = vadd.xlane.f32.xlu0 %v844
      %v846 = vpop.xlane.xlu0 %845
      %v847 = vsel %vm825, %v841, 0.0
      %848 = vadd.xlane.f32.xlu0 %v847
      %v849 = vpop.xlane.xlu0 %848
      %v850 = vsel %vm825, %v843, 0.0
      %851 = vadd.xlane.f32.xlu0 %v850
      %v852 = vpop.xlane.xlu0 %851
      %v853 = vrcp.pop %v846
      %v854 = vrcp.pop %v849
      %v855 = vrcp.pop %v852
      %v856 = vmul.f32 %v839, %v853
      %v857 = vmul.f32 %v841, %v854
      %v858 = vmul.f32 %v843, %v855
      %v859 = vpack.c.bf16 %v857, %v856
      %v860 = vpack.c.bf16 %v858, %v858
      %v861 = vpack.c.bf16 %v750, %v747
      %v862 = vpack.c.bf16 %v755, %v755
      %v864 = vsel %vm825, %v859, 0
      %v867 = vsel %vm825, %v860, 0
      %vm869 = vcmask 1043456
      %v871 = vsel %vm869, %v862, 0
      %873 = vmatprep.subr.bf16.mxu0 0
      %874 = vmatpush1.bf16.msra.mxu0 %v861
      %875 = vmatprep.subr.bf16.mxu0 0
      %876 = vmatpush1.bf16.msra.mxu0 %v871
      %877 = vmatprep.subr.bf16.mxu0 0
      %878 = vmatpush1.bf16.msra.mxu0 0
      %879 = vmatprep.subr.bf16.mxu0 0
      %880 = vmatpush1.bf16.msra.mxu0 0
      %881 = vmatprep.subr.bf16.mxu0 0
      %882 = vmatpush1.bf16.msra.mxu0 0
      %883 = vmatprep.subr.bf16.mxu0 0
      %884 = vmatpush1.bf16.msra.mxu0 0
      %885 = vmatprep.subr.bf16.mxu0 0
      %886 = vmatpush1.bf16.msra.mxu0 0
      %887 = vmatprep.subr.bf16.mxu0 0
      %888 = vmatpush1.bf16.msra.mxu0 0
      %889 = vmatprep.subr.bf16.mxu0 0
      %890 = vmatpush1.bf16.msra.mxu0 0
      %891 = vmatprep.subr.bf16.mxu0 0
      %892 = vmatpush1.bf16.msra.mxu0 0
      %893 = vmatprep.subr.bf16.mxu0 0
      %894 = vmatpush1.bf16.msra.mxu0 0
      %895 = vmatprep.subr.bf16.mxu0 0
      %896 = vmatpush1.bf16.msra.mxu0 0
      %897 = vmatprep.subr.bf16.mxu0 0
      %898 = vmatpush1.bf16.msra.mxu0 0
      %899 = vmatprep.subr.bf16.mxu0 0
      %900 = vmatpush1.bf16.msra.mxu0 0
      %901 = vmatprep.subr.bf16.mxu0 0
      %902 = vmatpush1.bf16.msra.mxu0 0
      %903 = vmatprep.subr.bf16.mxu0 0
      %904 = vmatpush1.bf16.msra.mxu0 0
      %905 = vmatprep.mubr.bf16.mxu0 0
      %906 = vmatmul.mubr.bf16.gmra.mrb[0].mxu0 %v864
      %v907 = vpop.f32.mrb[0].mxu0
      %v908 = vadd.f32 0.0, %v907
      %v909 = vpop.f32.mrb[0].mxu0
      %v910 = vpop.f32.mrb[0].mxu0
      %v911 = vadd.f32 0.0, %v910
      %v912 = vpop.f32.mrb[0].mxu0
      %913 = vmatprep.mubr.bf16.mxu0 0
      %914 = vmatmul.mubr.bf16.gmra.mrb[0].mxu0 %v867
      %v915 = vpop.f32.mrb[0].mxu0
      %v916 = vadd.f32 0.0, %v915
      %v917 = vpop.f32.mrb[0].mxu0
      %v918 = vpop.f32.mrb[0].mxu0
      %v919 = vpop.f32.mrb[0].mxu0
      %920 = vdwg.mxu0
      %v921 = vpack.c.bf16 %v911, %v908
      %v922 = vpack.c.bf16 %v916, %v916
      %v923 = vld [vmem:[%s11] sm:$0xff]
      %v924 = vld [vmem:[%s11 + $0x8] sm:$0xff]
      %v925 = vpack.c.bf16 %v924, %v923
      %s926 = scalar_lea.vmem %s5, 32
      %v927 = vld [vmem:[%s926] sm:$0xff]
      %v928 = vld [vmem:[%s926 + $0x8] sm:$0xff]
      %v929 = vld [vmem:[%s926 + $0x10] sm:$0xff]
      %v930 = vld [vmem:[%s926 + $0x18] sm:$0xff]
      %v931 = vpack.c.bf16 %v928, %v927
      %v932 = vpack.c.bf16 %v930, %v929
      %s933 = scalar_lea.vmem %s8, 1
      %v934 = vld [vmem:[%s933] sm:$0x1]
      %v936 = vlaneseq
      %v937 = vshrl.u32 %v936, 7
      %v938 = vsub.s32 0, %v937
      %v939 = vrot.slane %v934, %v938
      %941 = vmatprep.subr.bf16.mxu0 0
      %942 = vmatpush1.bf16.msra.mxu0 %v931
      %943 = vmatprep.subr.bf16.mxu0 0
      %944 = vmatpush1.bf16.msra.mxu0 %v932
      %945 = vmatprep.subr.bf16.mxu0 0
      %946 = vmatpush1.bf16.msra.mxu0 0
      %947 = vmatprep.subr.bf16.mxu0 0
      %948 = vmatpush1.bf16.msra.mxu0 0
      %949 = vmatprep.subr.bf16.mxu0 0
      %950 = vmatpush1.bf16.msra.mxu0 0
      %951 = vmatprep.subr.bf16.mxu0 0
      %952 = vmatpush1.bf16.msra.mxu0 0
      %953 = vmatprep.subr.bf16.mxu0 0
      %954 = vmatpush1.bf16.msra.mxu0 0
      %955 = vmatprep.subr.bf16.mxu0 0
      %956 = vmatpush1.bf16.msra.mxu0 0
      %957 = vmatprep.subr.bf16.mxu0 0
      %958 = vmatpush1.bf16.msra.mxu0 0
      %959 = vmatprep.subr.bf16.mxu0 0
      %960 = vmatpush1.bf16.msra.mxu0 0
      %961 = vmatprep.subr.bf16.mxu0 0
      %962 = vmatpush1.bf16.msra.mxu0 0
      %963 = vmatprep.subr.bf16.mxu0 0
      %964 = vmatpush1.bf16.msra.mxu0 0
      %965 = vmatprep.subr.bf16.mxu0 0
      %966 = vmatpush1.bf16.msra.mxu0 0
      %967 = vmatprep.subr.bf16.mxu0 0
      %968 = vmatpush1.bf16.msra.mxu0 0
      %969 = vmatprep.subr.bf16.mxu0 0
      %970 = vmatpush1.bf16.msra.mxu0 0
      %971 = vmatprep.subr.bf16.mxu0 0
      %972 = vmatpush1.bf16.msra.mxu0 0
      %973 = vmatprep.mubr.bf16.mxu0 0
      %974 = vmatmul.mubr.bf16.gmra.mrb[0].mxu0 %v585
      %v975 = vpop.f32.mrb[0].mxu0
      %v976 = vadd.f32 %v939, %v975
      %v977 = vpop.f32.mrb[0].mxu0
      %v978 = vpop.f32.mrb[0].mxu0
      %v979 = vadd.f32 %v939, %v978
      %v980 = vpop.f32.mrb[0].mxu0
      %981 = vmatprep.mubr.bf16.mxu0 0
      %982 = vmatmul.mubr.bf16.gmra.mrb[0].mxu0 %v588
      %v983 = vpop.f32.mrb[0].mxu0
      %v984 = vadd.f32 %v939, %v983
      %v985 = vpop.f32.mrb[0].mxu0
      %v986 = vpop.f32.mrb[0].mxu0
      %v987 = vpop.f32.mrb[0].mxu0
      %988 = vdwg.mxu0
      %s989 = scalar_lea.vmem %s6, 32
      %v990 = vld [vmem:[%s989] sm:$0xff]
      %v991 = vld [vmem:[%s989 + $0x8] sm:$0xff]
      %v992 = vld [vmem:[%s989 + $0x10] sm:$0xff]
      %v993 = vld [vmem:[%s989 + $0x18] sm:$0xff]
      %v994 = vpack.c.bf16 %v991, %v990
      %v995 = vpack.c.bf16 %v993, %v992
      %s996 = scalar_lea.vmem %s9, 1
      %v997 = vld [vmem:[%s996] sm:$0x1]
      %v999 = vlaneseq
      %v1000 = vshrl.u32 %v999, 7
      %v1001 = vsub.s32 0, %v1000
      %v1002 = vrot.slane %v997, %v1001
      %1004 = vmatprep.subr.bf16.mxu0 0
      %1005 = vmatpush1.bf16.msra.mxu0 %v994
      %1006 = vmatprep.subr.bf16.mxu0 0
      %1007 = vmatpush1.bf16.msra.mxu0 %v995
      %1008 = vmatprep.subr.bf16.mxu0 0
      %1009 = vmatpush1.bf16.msra.mxu0 0
      %1010 = vmatprep.subr.bf16.mxu0 0
      %1011 = vmatpush1.bf16.msra.mxu0 0
      %1012 = vmatprep.subr.bf16.mxu0 0
      %1013 = vmatpush1.bf16.msra.mxu0 0
      %1014 = vmatprep.subr.bf16.mxu0 0
      %1015 = vmatpush1.bf16.msra.mxu0 0
      %1016 = vmatprep.subr.bf16.mxu0 0
      %1017 = vmatpush1.bf16.msra.mxu0 0
      %1018 = vmatprep.subr.bf16.mxu0 0
      %1019 = vmatpush1.bf16.msra.mxu0 0
      %1020 = vmatprep.subr.bf16.mxu0 0
      %1021 = vmatpush1.bf16.msra.mxu0 0
      %1022 = vmatprep.subr.bf16.mxu0 0
      %1023 = vmatpush1.bf16.msra.mxu0 0
      %1024 = vmatprep.subr.bf16.mxu0 0
      %1025 = vmatpush1.bf16.msra.mxu0 0
      %1026 = vmatprep.subr.bf16.mxu0 0
      %1027 = vmatpush1.bf16.msra.mxu0 0
      %1028 = vmatprep.subr.bf16.mxu0 0
      %1029 = vmatpush1.bf16.msra.mxu0 0
      %1030 = vmatprep.subr.bf16.mxu0 0
      %1031 = vmatpush1.bf16.msra.mxu0 0
      %1032 = vmatprep.subr.bf16.mxu0 0
      %1033 = vmatpush1.bf16.msra.mxu0 0
      %1034 = vmatprep.subr.bf16.mxu0 0
      %1035 = vmatpush1.bf16.msra.mxu0 0
      %1036 = vmatprep.mubr.bf16.mxu0 0
      %1037 = vmatmul.mubr.bf16.gmra.mrb[0].mxu0 %v585
      %v1038 = vpop.f32.mrb[0].mxu0
      %v1039 = vadd.f32 %v1002, %v1038
      %v1040 = vpop.f32.mrb[0].mxu0
      %v1041 = vpop.f32.mrb[0].mxu0
      %v1042 = vadd.f32 %v1002, %v1041
      %v1043 = vpop.f32.mrb[0].mxu0
      %1044 = vmatprep.mubr.bf16.mxu0 0
      %1045 = vmatmul.mubr.bf16.gmra.mrb[0].mxu0 %v588
      %v1046 = vpop.f32.mrb[0].mxu0
      %v1047 = vadd.f32 %v1002, %v1046
      %v1048 = vpop.f32.mrb[0].mxu0
      %v1049 = vpop.f32.mrb[0].mxu0
      %v1050 = vpop.f32.mrb[0].mxu0
      %1051 = vdwg.mxu0
      %s1052 = scalar_lea.vmem %s7, 32
      %v1053 = vld [vmem:[%s1052] sm:$0xff]
      %v1054 = vld [vmem:[%s1052 + $0x8] sm:$0xff]
      %v1055 = vld [vmem:[%s1052 + $0x10] sm:$0xff]
      %v1056 = vld [vmem:[%s1052 + $0x18] sm:$0xff]
      %v1057 = vpack.c.bf16 %v1054, %v1053
      %v1058 = vpack.c.bf16 %v1056, %v1055
      %s1059 = scalar_lea.vmem %s10, 1
      %v1060 = vld [vmem:[%s1059] sm:$0x1]
      %v1062 = vlaneseq
      %v1063 = vshrl.u32 %v1062, 7
      %v1064 = vsub.s32 0, %v1063
      %v1065 = vrot.slane %v1060, %v1064
      %1067 = vmatprep.subr.bf16.mxu0 0
      %1068 = vmatpush1.bf16.msra.mxu0 %v1057
      %1069 = vmatprep.subr.bf16.mxu0 0
      %1070 = vmatpush1.bf16.msra.mxu0 %v1058
      %1071 = vmatprep.subr.bf16.mxu0 0
      %1072 = vmatpush1.bf16.msra.mxu0 0
      %1073 = vmatprep.subr.bf16.mxu0 0
      %1074 = vmatpush1.bf16.msra.mxu0 0
      %1075 = vmatprep.subr.bf16.mxu0 0
      %1076 = vmatpush1.bf16.msra.mxu0 0
      %1077 = vmatprep.subr.bf16.mxu0 0
      %1078 = vmatpush1.bf16.msra.mxu0 0
      %1079 = vmatprep.subr.bf16.mxu0 0
      %1080 = vmatpush1.bf16.msra.mxu0 0
      %1081 = vmatprep.subr.bf16.mxu0 0
      %1082 = vmatpush1.bf16.msra.mxu0 0
      %1083 = vmatprep.subr.bf16.mxu0 0
      %1084 = vmatpush1.bf16.msra.mxu0 0
      %1085 = vmatprep.subr.bf16.mxu0 0
      %1086 = vmatpush1.bf16.msra.mxu0 0
      %1087 = vmatprep.subr.bf16.mxu0 0
      %1088 = vmatpush1.bf16.msra.mxu0 0
      %1089 = vmatprep.subr.bf16.mxu0 0
      %1090 = vmatpush1.bf16.msra.mxu0 0
      %1091 = vmatprep.subr.bf16.mxu0 0
      %1092 = vmatpush1.bf16.msra.mxu0 0
      %1093 = vmatprep.subr.bf16.mxu0 0
      %1094 = vmatpush1.bf16.msra.mxu0 0
      %1095 = vmatprep.subr.bf16.mxu0 0
      %1096 = vmatpush1.bf16.msra.mxu0 0
      %1097 = vmatprep.subr.bf16.mxu0 0
      %1098 = vmatpush1.bf16.msra.mxu0 0
      %1099 = vmatprep.mubr.bf16.mxu0 0
      %1100 = vmatmul.mubr.bf16.gmra.mrb[0].mxu0 %v585
      %v1101 = vpop.f32.mrb[0].mxu0
      %v1102 = vadd.f32 %v1065, %v1101
      %v1103 = vpop.f32.mrb[0].mxu0
      %v1104 = vpop.f32.mrb[0].mxu0
      %v1105 = vadd.f32 %v1065, %v1104
      %v1106 = vpop.f32.mrb[0].mxu0
      %1107 = vmatprep.mubr.bf16.mxu0 0
      %1108 = vmatmul.mubr.bf16.gmra.mrb[0].mxu0 %v588
      %v1109 = vpop.f32.mrb[0].mxu0
      %v1110 = vadd.f32 %v1065, %v1109
      %v1111 = vpop.f32.mrb[0].mxu0
      %v1112 = vpop.f32.mrb[0].mxu0
      %v1113 = vpop.f32.mrb[0].mxu0
      %1114 = vdwg.mxu0
      %v1115 = vpack.c.bf16 %v979, %v976
      %v1116 = vpack.c.bf16 %v984, %v984
      %v1117 = vpack.c.bf16 %v1042, %v1039
      %v1118 = vpack.c.bf16 %v1047, %v1047
      %v1120 = vsel %vm764, %v1115, 0
      %v1123 = vsel %vm764, %v1116, 0
      %v1126 = vsel %vm764, %v1117, 0
      %v1129 = vsel %vm764, %v1118, 0
      %1131 = vmatprep.subr.bf16.mxu0 0
      %1132 = vmatpush1.bf16.xpose.msra.mxu0 %v1126
      %1133 = vmatprep.subr.bf16.mxu0 0
      %1134 = vmatpush1.bf16.xpose.msra.mxu0 %v1129
      %1135 = vmatprep.subr.bf16.mxu0 0
      %1136 = vmatpush1.bf16.xpose.msra.mxu0 0
      %1137 = vmatprep.subr.bf16.mxu0 0
      %1138 = vmatpush1.bf16.xpose.msra.mxu0 0
      %1139 = vmatprep.subr.bf16.mxu0 0
      %1140 = vmatpush1.bf16.xpose.msra.mxu0 0
      %1141 = vmatprep.subr.bf16.mxu0 0
      %1142 = vmatpush1.bf16.xpose.msra.mxu0 0
      %1143 = vmatprep.subr.bf16.mxu0 0
      %1144 = vmatpush1.bf16.xpose.msra.mxu0 0
      %1145 = vmatprep.subr.bf16.mxu0 0
      %1146 = vmatpush1.bf16.xpose.msra.mxu0 0
      %1147 = vmatprep.subr.bf16.mxu0 0
      %1148 = vmatpush1.bf16.xpose.msra.mxu0 0
      %1149 = vmatprep.subr.bf16.mxu0 0
      %1150 = vmatpush1.bf16.xpose.msra.mxu0 0
      %1151 = vmatprep.subr.bf16.mxu0 0
      %1152 = vmatpush1.bf16.xpose.msra.mxu0 0
      %1153 = vmatprep.subr.bf16.mxu0 0
      %1154 = vmatpush1.bf16.xpose.msra.mxu0 0
      %1155 = vmatprep.subr.bf16.mxu0 0
      %1156 = vmatpush1.bf16.xpose.msra.mxu0 0
      %1157 = vmatprep.subr.bf16.mxu0 0
      %1158 = vmatpush1.bf16.xpose.msra.mxu0 0
      %1159 = vmatprep.subr.bf16.mxu0 0
      %1160 = vmatpush1.bf16.xpose.msra.mxu0 0
      %1161 = vmatprep.subr.bf16.mxu0 0
      %1162 = vmatpush1.bf16.xpose.msra.mxu0 0
      %1163 = vmatprep.mubr.bf16.mxu0 0
      %1164 = vmatmul.mubr.bf16.gmra.mrb[0].mxu0 %v1120
      %v1165 = vpop.f32.mrb[0].mxu0
      %v1166 = vadd.f32 %v570, %v1165
      %v1167 = vpop.f32.mrb[0].mxu0
      %v1168 = vpop.f32.mrb[0].mxu0
      %v1169 = vadd.f32 %v570, %v1168
      %v1170 = vpop.f32.mrb[0].mxu0
      %1171 = vmatprep.mubr.bf16.mxu0 0
      %1172 = vmatmul.mubr.bf16.gmra.mrb[0].mxu0 %v1123
      %v1173 = vpop.f32.mrb[0].mxu0
      %v1174 = vadd.f32 %v570, %v1173
      %v1175 = vpop.f32.mrb[0].mxu0
      %v1176 = vpop.f32.mrb[0].mxu0
      %v1177 = vpop.f32.mrb[0].mxu0
      %1178 = vdwg.mxu0
      %v1179 = vsel %vm825, %v1166, -inf
      %1180 = vmax.xlane.f32.xlu0 %v1179
      %v1181 = vpop.xlane.xlu0 %1180
      %v1182 = vsel %vm825, %v1169, -inf
      %1183 = vmax.xlane.f32.xlu0 %v1182
      %v1184 = vpop.xlane.xlu0 %1183
      %v1185 = vsel %vm825, %v1174, -inf
      %1186 = vmax.xlane.f32.xlu0 %v1185
      %v1187 = vpop.xlane.xlu0 %1186
      %v1188 = vsub.f32 %v1166, %v1181
      %v1189 = vsub.f32 %v1169, %v1184
      %v1190 = vsub.f32 %v1174, %v1187
      %v1191 = vmul.f32 %v1188, 1.442695
      %v1192 = vpow.pop %v1191
      %v1193 = vmul.f32 %v1189, 1.442695
      %v1194 = vpow.pop %v1193
      %v1195 = vmul.f32 %v1190, 1.442695
      %v1196 = vpow.pop %v1195
      %v1197 = vsel %vm825, %v1192, 0.0
      %1198 = vadd.xlane.f32.xlu0 %v1197
      %v1199 = vpop.xlane.xlu0 %1198
      %v1200 = vsel %vm825, %v1194, 0.0
      %1201 = vadd.xlane.f32.xlu0 %v1200
      %v1202 = vpop.xlane.xlu0 %1201
      %v1203 = vsel %vm825, %v1196, 0.0
      %1204 = vadd.xlane.f32.xlu0 %v1203
      %v1205 = vpop.xlane.xlu0 %1204
      %v1206 = vrcp.pop %v1199
      %v1207 = vrcp.pop %v1202
      %v1208 = vrcp.pop %v1205
      %v1209 = vmul.f32 %v1192, %v1206
      %v1210 = vmul.f32 %v1194, %v1207
      %v1211 = vmul.f32 %v1196, %v1208
      %v1212 = vpack.c.bf16 %v1210, %v1209
      %v1213 = vpack.c.bf16 %v1211, %v1211
      %v1214 = vpack.c.bf16 %v1105, %v1102
      %v1215 = vpack.c.bf16 %v1110, %v1110
      %v1217 = vsel %vm825, %v1212, 0
      %v1220 = vsel %vm825, %v1213, 0
      %v1223 = vsel %vm869, %v1215, 0
      %1225 = vmatprep.subr.bf16.mxu0 0
      %1226 = vmatpush1.bf16.msra.mxu0 %v1214
      %1227 = vmatprep.subr.bf16.mxu0 0
      %1228 = vmatpush1.bf16.msra.mxu0 %v1223
      %1229 = vmatprep.subr.bf16.mxu0 0
      %1230 = vmatpush1.bf16.msra.mxu0 0
      %1231 = vmatprep.subr.bf16.mxu0 0
      %1232 = vmatpush1.bf16.msra.mxu0 0
      %1233 = vmatprep.subr.bf16.mxu0 0
      %1234 = vmatpush1.bf16.msra.mxu0 0
      %1235 = vmatprep.subr.bf16.mxu0 0
      %1236 = vmatpush1.bf16.msra.mxu0 0
      %1237 = vmatprep.subr.bf16.mxu0 0
      %1238 = vmatpush1.bf16.msra.mxu0 0
      %1239 = vmatprep.subr.bf16.mxu0 0
      %1240 = vmatpush1.bf16.msra.mxu0 0
      %1241 = vmatprep.subr.bf16.mxu0 0
      %1242 = vmatpush1.bf16.msra.mxu0 0
      %1243 = vmatprep.subr.bf16.mxu0 0
      %1244 = vmatpush1.bf16.msra.mxu0 0
      %1245 = vmatprep.subr.bf16.mxu0 0
      %1246 = vmatpush1.bf16.msra.mxu0 0
      %1247 = vmatprep.subr.bf16.mxu0 0
      %1248 = vmatpush1.bf16.msra.mxu0 0
      %1249 = vmatprep.subr.bf16.mxu0 0
      %1250 = vmatpush1.bf16.msra.mxu0 0
      %1251 = vmatprep.subr.bf16.mxu0 0
      %1252 = vmatpush1.bf16.msra.mxu0 0
      %1253 = vmatprep.subr.bf16.mxu0 0
      %1254 = vmatpush1.bf16.msra.mxu0 0
      %1255 = vmatprep.subr.bf16.mxu0 0
      %1256 = vmatpush1.bf16.msra.mxu0 0
      %1257 = vmatprep.mubr.bf16.mxu0 0
      %1258 = vmatmul.mubr.bf16.gmra.mrb[0].mxu0 %v1217
      %v1259 = vpop.f32.mrb[0].mxu0
      %v1260 = vadd.f32 0.0, %v1259
      %v1261 = vpop.f32.mrb[0].mxu0
      %v1262 = vpop.f32.mrb[0].mxu0
      %v1263 = vadd.f32 0.0, %v1262
      %v1264 = vpop.f32.mrb[0].mxu0
      %1265 = vmatprep.mubr.bf16.mxu0 0
      %1266 = vmatmul.mubr.bf16.gmra.mrb[0].mxu0 %v1220
      %v1267 = vpop.f32.mrb[0].mxu0
      %v1268 = vadd.f32 0.0, %v1267
      %v1269 = vpop.f32.mrb[0].mxu0
      %v1270 = vpop.f32.mrb[0].mxu0
      %v1271 = vpop.f32.mrb[0].mxu0
      %1272 = vdwg.mxu0
      %v1273 = vpack.c.bf16 %v1263, %v1260
      %v1274 = vpack.c.bf16 %v1268, %v1268
      %s1275 = scalar_lea.vmem %s11, 16
      %v1276 = vld [vmem:[%s1275] sm:$0xff]
      %v1277 = vld [vmem:[%s1275 + $0x8] sm:$0xff]
      %v1278 = vpack.c.bf16 %v1277, %v1276
      %v1280 = vsel %vm764, %v1273, 0
      %v1283 = vsel %vm764, %v1274, 0
      %1285 = vmatprep.subr.bf16.mxu0 0
      %1286 = vmatpush1.bf16.msra.mxu0 %v1278
      %1287 = vmatprep.subr.bf16.mxu0 0
      %1288 = vmatpush1.bf16.msra.mxu0 0
      %1289 = vmatprep.subr.bf16.mxu0 0
      %1290 = vmatpush1.bf16.msra.mxu0 0
      %1291 = vmatprep.subr.bf16.mxu0 0
      %1292 = vmatpush1.bf16.msra.mxu0 0
      %1293 = vmatprep.subr.bf16.mxu0 0
      %1294 = vmatpush1.bf16.msra.mxu0 0
      %1295 = vmatprep.subr.bf16.mxu0 0
      %1296 = vmatpush1.bf16.msra.mxu0 0
      %1297 = vmatprep.subr.bf16.mxu0 0
      %1298 = vmatpush1.bf16.msra.mxu0 0
      %1299 = vmatprep.subr.bf16.mxu0 0
      %1300 = vmatpush1.bf16.msra.mxu0 0
      %1301 = vmatprep.subr.bf16.mxu0 0
      %1302 = vmatpush1.bf16.msra.mxu0 0
      %1303 = vmatprep.subr.bf16.mxu0 0
      %1304 = vmatpush1.bf16.msra.mxu0 0
      %1305 = vmatprep.subr.bf16.mxu0 0
      %1306 = vmatpush1.bf16.msra.mxu0 0
      %1307 = vmatprep.subr.bf16.mxu0 0
      %1308 = vmatpush1.bf16.msra.mxu0 0
      %1309 = vmatprep.subr.bf16.mxu0 0
      %1310 = vmatpush1.bf16.msra.mxu0 0
      %1311 = vmatprep.subr.bf16.mxu0 0
      %1312 = vmatpush1.bf16.msra.mxu0 0
      %1313 = vmatprep.subr.bf16.mxu0 0
      %1314 = vmatpush1.bf16.msra.mxu0 0
      %1315 = vmatprep.subr.bf16.mxu0 0
      %1316 = vmatpush1.bf16.msra.mxu0 0
      %1317 = vmatprep.mubr.bf16.mxu0 0
      %1318 = vmatmul.mubr.bf16.gmra.mrb[0].mxu0 %v1280
      %v1319 = vpop.f32.mrb[0].mxu0
      %v1320 = vadd.f32 0.0, %v1319
      %v1321 = vpop.f32.mrb[0].mxu0
      %v1322 = vpop.f32.mrb[0].mxu0
      %v1323 = vadd.f32 0.0, %v1322
      %v1324 = vpop.f32.mrb[0].mxu0
      %1325 = vmatprep.mubr.bf16.mxu0 0
      %1326 = vmatmul.mubr.bf16.gmra.mrb[0].mxu0 %v1283
      %v1327 = vpop.f32.mrb[0].mxu0
      %v1328 = vadd.f32 0.0, %v1327
      %v1329 = vpop.f32.mrb[0].mxu0
      %v1330 = vpop.f32.mrb[0].mxu0
      %v1331 = vpop.f32.mrb[0].mxu0
      %1332 = vdwg.mxu0
      %v1334 = vsel %vm764, %v921, 0
      %v1337 = vsel %vm764, %v922, 0
      %1339 = vmatprep.subr.bf16.mxu0 0
      %1340 = vmatpush1.bf16.msra.mxu0 %v925
      %1341 = vmatprep.subr.bf16.mxu0 0
      %1342 = vmatpush1.bf16.msra.mxu0 0
      %1343 = vmatprep.subr.bf16.mxu0 0
      %1344 = vmatpush1.bf16.msra.mxu0 0
      %1345 = vmatprep.subr.bf16.mxu0 0
      %1346 = vmatpush1.bf16.msra.mxu0 0
      %1347 = vmatprep.subr.bf16.mxu0 0
      %1348 = vmatpush1.bf16.msra.mxu0 0
      %1349 = vmatprep.subr.bf16.mxu0 0
      %1350 = vmatpush1.bf16.msra.mxu0 0
      %1351 = vmatprep.subr.bf16.mxu0 0
      %1352 = vmatpush1.bf16.msra.mxu0 0
      %1353 = vmatprep.subr.bf16.mxu0 0
      %1354 = vmatpush1.bf16.msra.mxu0 0
      %1355 = vmatprep.subr.bf16.mxu0 0
      %1356 = vmatpush1.bf16.msra.mxu0 0
      %1357 = vmatprep.subr.bf16.mxu0 0
      %1358 = vmatpush1.bf16.msra.mxu0 0
      %1359 = vmatprep.subr.bf16.mxu0 0
      %1360 = vmatpush1.bf16.msra.mxu0 0
      %1361 = vmatprep.subr.bf16.mxu0 0
      %1362 = vmatpush1.bf16.msra.mxu0 0
      %1363 = vmatprep.subr.bf16.mxu0 0
      %1364 = vmatpush1.bf16.msra.mxu0 0
      %1365 = vmatprep.subr.bf16.mxu0 0
      %1366 = vmatpush1.bf16.msra.mxu0 0
      %1367 = vmatprep.subr.bf16.mxu0 0
      %1368 = vmatpush1.bf16.msra.mxu0 0
      %1369 = vmatprep.subr.bf16.mxu0 0
      %1370 = vmatpush1.bf16.msra.mxu0 0
      %1371 = vmatprep.mubr.bf16.mxu0 0
      %1372 = vmatmul.mubr.bf16.gmra.mrb[0].mxu0 %v1334
      %v1373 = vpop.f32.mrb[0].mxu0
      %v1374 = vadd.f32 %v1320, %v1373
      %v1375 = vpop.f32.mrb[0].mxu0
      %v1376 = vpop.f32.mrb[0].mxu0
      %v1377 = vadd.f32 %v1323, %v1376
      %v1378 = vpop.f32.mrb[0].mxu0
      %1379 = vmatprep.mubr.bf16.mxu0 0
      %1380 = vmatmul.mubr.bf16.gmra.mrb[0].mxu0 %v1337
      %v1381 = vpop.f32.mrb[0].mxu0
      %v1382 = vadd.f32 %v1328, %v1381
      %v1383 = vpop.f32.mrb[0].mxu0
      %v1384 = vpop.f32.mrb[0].mxu0
      %v1385 = vpop.f32.mrb[0].mxu0
      %1386 = vdwg.mxu0
      %v1387 = vadd.f32 %v503, %v1374
      %v1388 = vadd.f32 %v504, %v1377
      %v1389 = vadd.f32 %v505, %v1382
      %v1390 = vld [vmem:[%s12] sm:$0x1]
      %v1392 = vlaneseq
      %v1393 = vshrl.u32 %v1392, 7
      %v1394 = vsub.s32 0, %v1393
      %v1395 = vrot.slane %v1390, %v1394
      %v1397 = vadd.f32 %v1387, %v1395
      %v1398 = vadd.f32 %v1388, %v1395
      %v1399 = vadd.f32 %v1389, %v1395
      %1400 = vst.msk [vmem:[%s440] sm:$0xff] %vm447, %v1397
      %1401 = vst.msk [vmem:[%s440 + $0x8] sm:$0xff] %vm447, %v1398
      %1402 = vst.msk [vmem:[%s440 + $0x10] sm:$0xff] %vm447, %v1399
      %p1403 = scmp.lt.s32.totalorder %s24, 1
      %s1404 = scalar_select %p1403, %s24, 1
      %s1405 = smul.addr %s1404, 3
      %s1406 = smul.addr %s1405, 8
      %s1407 = scalar_lea.vmem %s13, %s1406
      // Predicated region
      $region73: #{image_encoder_wrapper_forward.5} parent=71 // pred_check
        %p1408 = pneg %p320
      $region74: #{image_encoder_wrapper_forward.5} parent=71 // pred_check_branch
        %1410 = sbr.rel (%p1408) target = $region76
      $region75: #{image_encoder_wrapper_forward.5} parent=71 // pred_region
        _
      $region76: #{image_encoder_wrapper_forward.5} parent=71 // pred_fallthru
        _
    $region72: #{image_encoder_wrapper_forward.5} parent=5 // pred_fallthru
      _
    %p1411 = scmp.le.s32.totalorder 2, %s19
    // Predicated region
    $region77: #{image_encoder_wrapper_forward.5} parent=5 // pred_check
      %p1412 = pneg %p1411
    $region78: #{image_encoder_wrapper_forward.5} parent=5 // pred_check_branch
      %1414 = sbr.rel (%p1412) target = $region80
    $region79: #{image_encoder_wrapper_forward.5} parent=5 // pred_region
      %s1415 = ssub.s32 %s19, 2
      // Predicated region
      $region81: #{image_encoder_wrapper_forward.5} parent=79 // pred_check
        %p1416 = pneg %p326
      $region82: #{image_encoder_wrapper_forward.5} parent=79 // pred_check_branch
        %1418 = sbr.rel (%p1416) target = $region84
      $region83: #{image_encoder_wrapper_forward.5} parent=79 // pred_region
        %p1419 = scmp.lt.s32.totalorder %s25, 1
        %s1420 = scalar_select %p1419, %s25, 1
        %s1421 = smul.addr %s1420, 3
        %s1422 = smul.addr %s1421, 8
        %s1423 = scalar_lea.vmem %s13, %s1422
      $region84: #{image_encoder_wrapper_forward.5} parent=79 // pred_fallthru
        _
    $region80: #{image_encoder_wrapper_forward.5} parent=5 // pred_fallthru
      _
  $region6: #{image_encoder_wrapper_forward.5} parent=0 // loop_footer
    %s23 = sadd.s32 1, %s19
  $region7: #{image_encoder_wrapper_forward.5} parent=0 // loop_footer_branch
    %18 = sbr.rel target = $region3
  $region8: #{image_encoder_wrapper_forward.5} parent=0 // loop_exit
    _

</llo_original>
